<compile_context>
chip_gen: v5e
topology: v5e:2x2
jax: 0.10.0
libtpu: 0.0.40
codegen_flags: <defaults>
</compile_context>

<pallas_src>
import math
import functools

import jax
import jax.numpy as jnp
import numpy as np
from jax.experimental import pallas as pl
from jax.experimental.pallas import tpu as pltpu


def _mha_kernel(x_ref, wqkv_ref, bqkv_ref, wo_ref, bo_ref, out_ref,
                *, n_heads, d_k):
    """One batch element per grid step.

    x_ref    : (1, S, D)   bf16 VMEM tile
    wqkv_ref : (D, 3D)     bf16 fused [Wq*scale | Wk | Wv], pre-transposed
    bqkv_ref : (1, 3D)     f32  fused [b_q*scale | b_k | b_v]
    wo_ref   : (D, D)      bf16 Wo, pre-transposed
    bo_ref   : (1, D)      f32
    out_ref  : (1, S, D)   f32
    """
    d_model = n_heads * d_k
    x = x_ref[0]                                                   # (S, D) bf16
    S = x.shape[0]

    # --- fused Q/K/V projection: one full-depth-D MXU pass with N = 3D.
    # 1/sqrt(d_k) is already folded into the Wq / b_q slices by the wrapper.
    qkv = (jnp.dot(x, wqkv_ref[...], preferred_element_type=jnp.float32)
           + bqkv_ref[...])                                        # (S, 3D) f32
    qkv = qkv.astype(jnp.bfloat16)                                 # MXU operands

    # --- head split: one D-aligned slice + one relayout per tensor
    #     (S, D) -> (S, H, d_k) -> (H, S, d_k); no per-head lane slicing.
    def to_heads(t):
        return jnp.transpose(t.reshape(S, n_heads, d_k), (1, 0, 2))

    q = to_heads(qkv[:, :d_model])
    k = to_heads(qkv[:, d_model:2 * d_model])
    v = to_heads(qkv[:, 2 * d_model:])

    # --- batched scaled-dot-product attention (head = batch dim, no k.T).
    scores = jnp.einsum('hqd,hkd->hqk', q, k,
                        preferred_element_type=jnp.float32)        # (H, S, S) f32
    # mask is None; attention dropout prob = 0.0 -> identity.
    m = jnp.max(scores, axis=-1, keepdims=True)
    e = jnp.exp(scores - m)
    attn = e * pl.reciprocal(jnp.sum(e, axis=-1, keepdims=True), approx=True)
    ctx = jnp.einsum('hqk,hkd->hqd', attn.astype(jnp.bfloat16), v,
                     preferred_element_type=jnp.float32)           # (H, S, d_k) f32

    # --- output projection fused with the head reduction: concat heads back
    # to (S, D) once, then a single full-depth-D matmul.  No (H, S, D)
    # intermediate and no H-way cross-sublane sum.
    ctx_c = jnp.transpose(ctx, (1, 0, 2)).reshape(S, d_model).astype(jnp.bfloat16)
    out = (jnp.dot(ctx_c, wo_ref[...], preferred_element_type=jnp.float32)
           + bo_ref[...])                                          # (S, D) f32
    # output dropout prob = 0.0 -> identity.
    out_ref[0] = out.astype(out_ref.dtype)


def _make_call(B, S, D, n_heads, d_k, out_dtype, *, single_buffer_weights):
    kernel = functools.partial(_mha_kernel, n_heads=n_heads, d_k=d_k)
    x_spec = pl.BlockSpec((1, S, D), lambda b: (b, 0, 0))
    out_spec = pl.BlockSpec((1, S, D), lambda b: (b, 0, 0))
    # Constant-index weight operands never re-DMA; single-buffering them
    # halves their VMEM footprint (important on v7x's 64 MiB).
    wkw = {"pipeline_mode": pl.Buffered(1)} if single_buffer_weights else {}
    weight_specs = [
        pl.BlockSpec((D, 3 * D), lambda b: (0, 0), **wkw),
        pl.BlockSpec((1, 3 * D), lambda b: (0, 0), **wkw),
        pl.BlockSpec((D, D), lambda b: (0, 0), **wkw),
        pl.BlockSpec((1, D), lambda b: (0, 0), **wkw),
    ]
    return pl.pallas_call(
        kernel,
        out_shape=jax.ShapeDtypeStruct((B, S, D), out_dtype),
        grid_spec=pltpu.PrefetchScalarGridSpec(
            num_scalar_prefetch=0,
            grid=(B,),
            in_specs=[x_spec] + weight_specs,
            out_specs=out_spec,
        ),
        compiler_params=pltpu.CompilerParams(
            dimension_semantics=("parallel",),
            # 48 MiB: stays under v7x's 64 MiB physical VMEM while giving
            # v5e/v6e (128 MiB) plenty of headroom for larger shapes.
            vmem_limit_bytes=48 * 1024 * 1024),
    )


def multi_head_attention(x, params, n_heads):
    """x: (B, S, D) float32.  params: dict of weights/biases (PyTorch layout)."""
    B, S, D = x.shape
    assert D % n_heads == 0
    d_k = D // n_heads
    scale = 1.0 / math.sqrt(d_k)

    # PyTorch nn.Linear stores W as (out, in); kernel wants y = x @ W + b.
    # Fold the 1/sqrt(d_k) softmax scale into Wq / b_q once, here.
    w_qkv = jnp.concatenate(
        [params["w_q"].T * scale, params["w_k"].T, params["w_v"].T],
        axis=1).astype(jnp.bfloat16)                                # (D, 3D)
    b_qkv = jnp.concatenate(
        [params["b_q"] * scale, params["b_k"], params["b_v"]]
    ).reshape(1, 3 * D).astype(jnp.float32)                         # (1, 3D)
    w_o = params["w_o"].T.astype(jnp.bfloat16)                      # (D, D)
    b_o = params["b_o"].reshape(1, D).astype(jnp.float32)           # (1, D)
    x_b = x.astype(jnp.bfloat16)

    args = (x_b, w_qkv, b_qkv, w_o, b_o)
    try:
        return _make_call(B, S, D, n_heads, d_k, x.dtype,
                          single_buffer_weights=True)(*args)
    except Exception:
        # Fallback: default (double-buffered) weight specs if Buffered(1) is
        # rejected by this jax/Mosaic version.  Same semantics, more VMEM.
        return _make_call(B, S, D, n_heads, d_k, x.dtype,
                          single_buffer_weights=False)(*args)


def _reference_mha(x, params, n_heads):
    """Plain-JAX (f32) replica of the PyTorch forward (mask=None, dropout=0)."""
    B, S, D = x.shape
    d_k = D // n_heads

    def lin(t, w, b):
        return t @ w.T + b

    q = lin(x, params["w_q"], params["b_q"])
    k = lin(x, params["w_k"], params["b_k"])
    v = lin(x, params["w_v"], params["b_v"])

    def split(t):  # (B,S,D) -> (B,H,S,d_k)
        return t.reshape(B, S, n_heads, d_k).transpose(0, 2, 1, 3)

    q, k, v = split(q), split(k), split(v)
    scores = jnp.einsum("bhqd,bhkd->bhqk", q, k) / math.sqrt(d_k)
    attn = jax.nn.softmax(scores, axis=-1)
    ctx = jnp.einsum("bhqk,bhkd->bhqd", attn, v)
    ctx = ctx.transpose(0, 2, 1, 3).reshape(B, S, D)
    return lin(ctx, params["w_o"], params["b_o"])


if __name__ == "__main__":
    # Small shapes consistent with the module: batch=2, seq=8, d_model=32, heads=4.
    B, S, D, H = 2, 8, 32, 4

    key = jax.random.PRNGKey(0)
    ks = jax.random.split(key, 9)
    scale = 1.0 / math.sqrt(D)
    params = {
        "w_q": jax.random.normal(ks[0], (D, D), jnp.float32) * scale,
        "b_q": jax.random.normal(ks[1], (D,), jnp.float32) * 0.1,
        "w_k": jax.random.normal(ks[2], (D, D), jnp.float32) * scale,
        "b_k": jax.random.normal(ks[3], (D,), jnp.float32) * 0.1,
        "w_v": jax.random.normal(ks[4], (D, D), jnp.float32) * scale,
        "b_v": jax.random.normal(ks[5], (D,), jnp.float32) * 0.1,
        "w_o": jax.random.normal(ks[6], (D, D), jnp.float32) * scale,
        "b_o": jax.random.normal(ks[7], (D,), jnp.float32) * 0.1,
    }
    x = jax.random.normal(ks[8], (B, S, D), jnp.float32)

    out = multi_head_attention(x, params, H)
    out = jax.block_until_ready(out)

    ref = _reference_mha(x, params, H)
    # Tolerance reflects bf16 MXU operands (f32 accumulation) and the EUP
    # approximate reciprocal in the softmax denominator.
    np.testing.assert_allclose(np.asarray(out), np.asarray(ref),
                               rtol=2e-2, atol=2e-2)
    print("KERNEL_OK")
</pallas_src>

<mosaic_0001>
module attributes {stable_mosaic.version = 11 : i64} {
  func.func @_mha_kernel(%arg0: i32, %arg1: memref<1x8x32xbf16, #tpu.memory_space<vmem>>, %arg2: memref<32x96xbf16, #tpu.memory_space<vmem>>, %arg3: memref<1x96xf32, #tpu.memory_space<vmem>>, %arg4: memref<32x32xbf16, #tpu.memory_space<vmem>>, %arg5: memref<1x32xf32, #tpu.memory_space<vmem>>, %arg6: memref<1x8x32xf32, #tpu.memory_space<vmem>>) attributes {dimension_semantics = [#tpu.dimension_semantics<parallel>], iteration_bounds = array<i64: 2>, scalar_prefetch = 0 : i64, scratch_operands = 0 : i64, tpu.core_type = #tpu.core_type<tc>, window_params = [{transform_indices = @transform_0, window_bounds = array<i64: 1, 8, 32>}, {pipeline_mode = #tpu.pipeline_mode<synchronous>, transform_indices = @transform_1, window_bounds = array<i64: 32, 96>}, {pipeline_mode = #tpu.pipeline_mode<synchronous>, transform_indices = @transform_2, window_bounds = array<i64: 1, 96>}, {pipeline_mode = #tpu.pipeline_mode<synchronous>, transform_indices = @transform_3, window_bounds = array<i64: 32, 32>}, {pipeline_mode = #tpu.pipeline_mode<synchronous>, transform_indices = @transform_4, window_bounds = array<i64: 1, 32>}, {transform_indices = @transform_5, window_bounds = array<i64: 1, 8, 32>}]} {
    %c0 = arith.constant 0 : index
    %c0_0 = arith.constant 0 : index
    %c0_1 = arith.constant 0 : index
    %0 = vector.load %arg1[%c0, %c0_0, %c0_1] : memref<1x8x32xbf16, #tpu.memory_space<vmem>>, vector<1x8x32xbf16>
    %1 = vector.shape_cast %0 : vector<1x8x32xbf16> to vector<8x32xbf16>
    %c0_2 = arith.constant 0 : index
    %c0_3 = arith.constant 0 : index
    %2 = vector.load %arg2[%c0_2, %c0_3] : memref<32x96xbf16, #tpu.memory_space<vmem>>, vector<32x96xbf16>
    %cst = arith.constant dense<0.000000e+00> : vector<8x96xf32>
    %3 = tpu.matmul %1, %2, %cst {dimension_numbers = #tpu.dot_dimension_numbers<[1], [0], [0], [1], [0, 0, 1, 1], [], []>} : vector<8x32xbf16>, vector<32x96xbf16>, vector<8x96xf32> -> vector<8x96xf32>
    %c0_4 = arith.constant 0 : index
    %c0_5 = arith.constant 0 : index
    %4 = vector.load %arg3[%c0_4, %c0_5] : memref<1x96xf32, #tpu.memory_space<vmem>>, vector<1x96xf32>
    %5 = vector.broadcast %4 : vector<1x96xf32> to vector<8x96xf32>
    %6 = arith.addf %3, %5 : vector<8x96xf32>
    %7 = arith.truncf %6 : vector<8x96xf32> to vector<8x96xbf16>
    %8 = vector.extract_strided_slice %7 {offsets = [0, 0], sizes = [8, 32], strides = [1, 1]} : vector<8x96xbf16> to vector<8x32xbf16>
    %9 = vector.shape_cast %8 : vector<8x32xbf16> to vector<8x4x8xbf16>
    %10 = tpu.transpose %9, [1, 0, 2] : vector<8x4x8xbf16> -> vector<4x8x8xbf16>
    %11 = vector.extract_strided_slice %7 {offsets = [0, 32], sizes = [8, 32], strides = [1, 1]} : vector<8x96xbf16> to vector<8x32xbf16>
    %12 = vector.shape_cast %11 : vector<8x32xbf16> to vector<8x4x8xbf16>
    %13 = tpu.transpose %12, [1, 0, 2] : vector<8x4x8xbf16> -> vector<4x8x8xbf16>
    %14 = vector.extract_strided_slice %7 {offsets = [0, 64], sizes = [8, 32], strides = [1, 1]} : vector<8x96xbf16> to vector<8x32xbf16>
    %15 = vector.shape_cast %14 : vector<8x32xbf16> to vector<8x4x8xbf16>
    %16 = tpu.transpose %15, [1, 0, 2] : vector<8x4x8xbf16> -> vector<4x8x8xbf16>
    "tpu.trace_start"() <{level = 10 : i32, message = "hqd,hkd->hqk"}> : () -> ()
    %cst_6 = arith.constant dense<0.000000e+00> : vector<4x8x8xf32>
    %17 = tpu.matmul %10, %13, %cst_6 {dimension_numbers = #tpu.dot_dimension_numbers<[2], [2], [1], [1], [0, 0, 0, 1, 1, 1], [0], [0]>} : vector<4x8x8xbf16>, vector<4x8x8xbf16>, vector<4x8x8xf32> -> vector<4x8x8xf32>
    "tpu.trace_stop"() : () -> ()
    %cst_7 = arith.constant dense<0xFF800000> : vector<4x8xf32>
    %18 = vector.multi_reduction <maximumf>, %17, %cst_7 [2] : vector<4x8x8xf32> to vector<4x8xf32>
    %19 = vector.shape_cast %18 : vector<4x8xf32> to vector<4x8x1xf32>
    %20 = vector.broadcast %19 : vector<4x8x1xf32> to vector<4x8x8xf32>
    %21 = arith.subf %17, %20 : vector<4x8x8xf32>
    %22 = math.exp %21 : vector<4x8x8xf32>
    %cst_8 = arith.constant dense<0.000000e+00> : vector<4x8xf32>
    %23 = vector.multi_reduction <add>, %22, %cst_8 [2] : vector<4x8x8xf32> to vector<4x8xf32>
    %24 = vector.shape_cast %23 : vector<4x8xf32> to vector<4x8x1xf32>
    %25 = tpu.reciprocal %24 {approx = true} : vector<4x8x1xf32> -> vector<4x8x1xf32>
    %26 = vector.broadcast %25 : vector<4x8x1xf32> to vector<4x8x8xf32>
    %27 = arith.mulf %22, %26 : vector<4x8x8xf32>
    %28 = arith.truncf %27 : vector<4x8x8xf32> to vector<4x8x8xbf16>
    "tpu.trace_start"() <{level = 10 : i32, message = "hqk,hkd->hqd"}> : () -> ()
    %cst_9 = arith.constant dense<0.000000e+00> : vector<4x8x8xf32>
    %29 = tpu.matmul %28, %16, %cst_9 {dimension_numbers = #tpu.dot_dimension_numbers<[2], [1], [1], [2], [0, 0, 0, 1, 1, 2], [0], [0]>} : vector<4x8x8xbf16>, vector<4x8x8xbf16>, vector<4x8x8xf32> -> vector<4x8x8xf32>
    "tpu.trace_stop"() : () -> ()
    %30 = tpu.transpose %29, [1, 0, 2] : vector<4x8x8xf32> -> vector<8x4x8xf32>
    %31 = vector.shape_cast %30 : vector<8x4x8xf32> to vector<8x32xf32>
    %32 = arith.truncf %31 : vector<8x32xf32> to vector<8x32xbf16>
    %c0_10 = arith.constant 0 : index
    %c0_11 = arith.constant 0 : index
    %33 = vector.load %arg4[%c0_10, %c0_11] : memref<32x32xbf16, #tpu.memory_space<vmem>>, vector<32x32xbf16>
    %cst_12 = arith.constant dense<0.000000e+00> : vector<8x32xf32>
    %34 = tpu.matmul %32, %33, %cst_12 {dimension_numbers = #tpu.dot_dimension_numbers<[1], [0], [0], [1], [0, 0, 1, 1], [], []>} : vector<8x32xbf16>, vector<32x32xbf16>, vector<8x32xf32> -> vector<8x32xf32>
    %c0_13 = arith.constant 0 : index
    %c0_14 = arith.constant 0 : index
    %35 = vector.load %arg5[%c0_13, %c0_14] : memref<1x32xf32, #tpu.memory_space<vmem>>, vector<1x32xf32>
    %36 = vector.broadcast %35 : vector<1x32xf32> to vector<8x32xf32>
    %37 = arith.addf %34, %36 : vector<8x32xf32>
    %c0_15 = arith.constant 0 : index
    %c0_16 = arith.constant 0 : index
    %c0_17 = arith.constant 0 : index
    %38 = vector.load %arg6[%c0_15, %c0_16, %c0_17] : memref<1x8x32xf32, #tpu.memory_space<vmem>>, vector<1x8x32xf32>
    %39 = vector.shape_cast %38 : vector<1x8x32xf32> to vector<8x32xf32>
    %40 = vector.shape_cast %37 : vector<8x32xf32> to vector<1x8x32xf32>
    tpu.vector_store %arg6[%c0_15, %c0_16, %c0_17], %40 {strides = array<i32>} : memref<1x8x32xf32, #tpu.memory_space<vmem>>, vector<1x8x32xf32>,
    return
  }
  func.func @transform_0(%arg0: i32) -> (i32, i32, i32) {
    %c0_i32 = arith.constant 0 : i32
    %c0_i32_0 = arith.constant 0 : i32
    %c0_i32_1 = arith.constant 0 : i32
    return %arg0, %c0_i32, %c0_i32_0 : i32, i32, i32
  }
  func.func @transform_1(%arg0: i32) -> (i32, i32) {
    %c0_i32 = arith.constant 0 : i32
    %c0_i32_0 = arith.constant 0 : i32
    %c0_i32_1 = arith.constant 0 : i32
    return %c0_i32, %c0_i32_0 : i32, i32
  }
  func.func @transform_2(%arg0: i32) -> (i32, i32) {
    %c0_i32 = arith.constant 0 : i32
    %c0_i32_0 = arith.constant 0 : i32
    %c0_i32_1 = arith.constant 0 : i32
    return %c0_i32, %c0_i32_0 : i32, i32
  }
  func.func @transform_3(%arg0: i32) -> (i32, i32) {
    %c0_i32 = arith.constant 0 : i32
    %c0_i32_0 = arith.constant 0 : i32
    %c0_i32_1 = arith.constant 0 : i32
    return %c0_i32, %c0_i32_0 : i32, i32
  }
  func.func @transform_4(%arg0: i32) -> (i32, i32) {
    %c0_i32 = arith.constant 0 : i32
    %c0_i32_0 = arith.constant 0 : i32
    %c0_i32_1 = arith.constant 0 : i32
    return %c0_i32, %c0_i32_0 : i32, i32
  }
  func.func @transform_5(%arg0: i32) -> (i32, i32, i32) {
    %c0_i32 = arith.constant 0 : i32
    %c0_i32_0 = arith.constant 0 : i32
    %c0_i32_1 = arith.constant 0 : i32
    return %arg0, %c0_i32, %c0_i32_0 : i32, i32, i32
  }
}

module attributes {stable_mosaic.version = 11 : i64} {
  func.func @_mha_kernel(%arg0: i32, %arg1: memref<1x8x32xbf16, #tpu.memory_space<vmem>>, %arg2: memref<32x96xbf16, #tpu.memory_space<vmem>>, %arg3: memref<1x96xf32, #tpu.memory_space<vmem>>, %arg4: memref<32x32xbf16, #tpu.memory_space<vmem>>, %arg5: memref<1x32xf32, #tpu.memory_space<vmem>>, %arg6: memref<1x8x32xf32, #tpu.memory_space<vmem>>) attributes {dimension_semantics = [#tpu.dimension_semantics<parallel>], iteration_bounds = array<i64: 2>, scalar_prefetch = 0 : i64, scratch_operands = 0 : i64, tpu.core_type = #tpu.core_type<tc>, window_params = [{transform_indices = @transform_0, window_bounds = array<i64: 1, 8, 32>}, {pipeline_mode = #tpu.pipeline_mode<synchronous>, transform_indices = @transform_1, window_bounds = array<i64: 32, 96>}, {pipeline_mode = #tpu.pipeline_mode<synchronous>, transform_indices = @transform_2, window_bounds = array<i64: 1, 96>}, {pipeline_mode = #tpu.pipeline_mode<synchronous>, transform_indices = @transform_3, window_bounds = array<i64: 32, 32>}, {pipeline_mode = #tpu.pipeline_mode<synchronous>, transform_indices = @transform_4, window_bounds = array<i64: 1, 32>}, {transform_indices = @transform_5, window_bounds = array<i64: 1, 8, 32>}]} {
    %c0 = arith.constant 0 : index
    %c0_0 = arith.constant 0 : index
    %c0_1 = arith.constant 0 : index
    %0 = vector.load %arg1[%c0, %c0_0, %c0_1] : memref<1x8x32xbf16, #tpu.memory_space<vmem>>, vector<1x8x32xbf16>
    %1 = vector.shape_cast %0 : vector<1x8x32xbf16> to vector<8x32xbf16>
    %c0_2 = arith.constant 0 : index
    %c0_3 = arith.constant 0 : index
    %2 = vector.load %arg2[%c0_2, %c0_3] : memref<32x96xbf16, #tpu.memory_space<vmem>>, vector<32x96xbf16>
    %cst = arith.constant dense<0.000000e+00> : vector<8x96xf32>
    %3 = tpu.matmul %1, %2, %cst {dimension_numbers = #tpu.dot_dimension_numbers<[1], [0], [0], [1], [0, 0, 1, 1], [], []>} : vector<8x32xbf16>, vector<32x96xbf16>, vector<8x96xf32> -> vector<8x96xf32>
    %c0_4 = arith.constant 0 : index
    %c0_5 = arith.constant 0 : index
    %4 = vector.load %arg3[%c0_4, %c0_5] : memref<1x96xf32, #tpu.memory_space<vmem>>, vector<1x96xf32>
    %5 = vector.broadcast %4 : vector<1x96xf32> to vector<8x96xf32>
    %6 = arith.addf %3, %5 : vector<8x96xf32>
    %7 = arith.truncf %6 : vector<8x96xf32> to vector<8x96xbf16>
    %8 = vector.extract_strided_slice %7 {offsets = [0, 0], sizes = [8, 32], strides = [1, 1]} : vector<8x96xbf16> to vector<8x32xbf16>
    %9 = vector.shape_cast %8 : vector<8x32xbf16> to vector<8x4x8xbf16>
    %10 = tpu.transpose %9, [1, 0, 2] : vector<8x4x8xbf16> -> vector<4x8x8xbf16>
    %11 = vector.extract_strided_slice %7 {offsets = [0, 32], sizes = [8, 32], strides = [1, 1]} : vector<8x96xbf16> to vector<8x32xbf16>
    %12 = vector.shape_cast %11 : vector<8x32xbf16> to vector<8x4x8xbf16>
    %13 = tpu.transpose %12, [1, 0, 2] : vector<8x4x8xbf16> -> vector<4x8x8xbf16>
    %14 = vector.extract_strided_slice %7 {offsets = [0, 64], sizes = [8, 32], strides = [1, 1]} : vector<8x96xbf16> to vector<8x32xbf16>
    %15 = vector.shape_cast %14 : vector<8x32xbf16> to vector<8x4x8xbf16>
    %16 = tpu.transpose %15, [1, 0, 2] : vector<8x4x8xbf16> -> vector<4x8x8xbf16>
    "tpu.trace_start"() <{level = 10 : i32, message = "hqd,hkd->hqk"}> : () -> ()
    %cst_6 = arith.constant dense<0.000000e+00> : vector<4x8x8xf32>
    %17 = tpu.matmul %10, %13, %cst_6 {dimension_numbers = #tpu.dot_dimension_numbers<[2], [2], [1], [1], [0, 0, 0, 1, 1, 1], [0], [0]>} : vector<4x8x8xbf16>, vector<4x8x8xbf16>, vector<4x8x8xf32> -> vector<4x8x8xf32>
    "tpu.trace_stop"() : () -> ()
    %cst_7 = arith.constant dense<0xFF800000> : vector<4x8xf32>
    %18 = vector.multi_reduction <maximumf>, %17, %cst_7 [2] : vector<4x8x8xf32> to vector<4x8xf32>
    %19 = vector.shape_cast %18 : vector<4x8xf32> to vector<4x8x1xf32>
    %20 = vector.broadcast %19 : vector<4x8x1xf32> to vector<4x8x8xf32>
    %21 = arith.subf %17, %20 : vector<4x8x8xf32>
    %22 = math.exp %21 : vector<4x8x8xf32>
    %cst_8 = arith.constant dense<0.000000e+00> : vector<4x8xf32>
    %23 = vector.multi_reduction <add>, %22, %cst_8 [2] : vector<4x8x8xf32> to vector<4x8xf32>
    %24 = vector.shape_cast %23 : vector<4x8xf32> to vector<4x8x1xf32>
    %25 = tpu.reciprocal %24 {approx = true} : vector<4x8x1xf32> -> vector<4x8x1xf32>
    %26 = vector.broadcast %25 : vector<4x8x1xf32> to vector<4x8x8xf32>
    %27 = arith.mulf %22, %26 : vector<4x8x8xf32>
    %28 = arith.truncf %27 : vector<4x8x8xf32> to vector<4x8x8xbf16>
    "tpu.trace_start"() <{level = 10 : i32, message = "hqk,hkd->hqd"}> : () -> ()
    %cst_9 = arith.constant dense<0.000000e+00> : vector<4x8x8xf32>
    %29 = tpu.matmul %28, %16, %cst_9 {dimension_numbers = #tpu.dot_dimension_numbers<[2], [1], [1], [2], [0, 0, 0, 1, 1, 2], [0], [0]>} : vector<4x8x8xbf16>, vector<4x8x8xbf16>, vector<4x8x8xf32> -> vector<4x8x8xf32>
    "tpu.trace_stop"() : () -> ()
    %30 = tpu.transpose %29, [1, 0, 2] : vector<4x8x8xf32> -> vector<8x4x8xf32>
    %31 = vector.shape_cast %30 : vector<8x4x8xf32> to vector<8x32xf32>
    %32 = arith.truncf %31 : vector<8x32xf32> to vector<8x32xbf16>
    %c0_10 = arith.constant 0 : index
    %c0_11 = arith.constant 0 : index
    %33 = vector.load %arg4[%c0_10, %c0_11] : memref<32x32xbf16, #tpu.memory_space<vmem>>, vector<32x32xbf16>
    %cst_12 = arith.constant dense<0.000000e+00> : vector<8x32xf32>
    %34 = tpu.matmul %32, %33, %cst_12 {dimension_numbers = #tpu.dot_dimension_numbers<[1], [0], [0], [1], [0, 0, 1, 1], [], []>} : vector<8x32xbf16>, vector<32x32xbf16>, vector<8x32xf32> -> vector<8x32xf32>
    %c0_13 = arith.constant 0 : index
    %c0_14 = arith.constant 0 : index
    %35 = vector.load %arg5[%c0_13, %c0_14] : memref<1x32xf32, #tpu.memory_space<vmem>>, vector<1x32xf32>
    %36 = vector.broadcast %35 : vector<1x32xf32> to vector<8x32xf32>
    %37 = arith.addf %34, %36 : vector<8x32xf32>
    %c0_15 = arith.constant 0 : index
    %c0_16 = arith.constant 0 : index
    %c0_17 = arith.constant 0 : index
    %38 = vector.load %arg6[%c0_15, %c0_16, %c0_17] : memref<1x8x32xf32, #tpu.memory_space<vmem>>, vector<1x8x32xf32>
    %39 = vector.shape_cast %38 : vector<1x8x32xf32> to vector<8x32xf32>
    %40 = vector.shape_cast %37 : vector<8x32xf32> to vector<1x8x32xf32>
    tpu.vector_store %arg6[%c0_15, %c0_16, %c0_17], %40 {strides = array<i32>} : memref<1x8x32xf32, #tpu.memory_space<vmem>>, vector<1x8x32xf32>,
    return
  }
  func.func @transform_0(%arg0: i32) -> (i32, i32, i32) {
    %c0_i32 = arith.constant 0 : i32
    %c0_i32_0 = arith.constant 0 : i32
    %c0_i32_1 = arith.constant 0 : i32
    return %arg0, %c0_i32, %c0_i32_0 : i32, i32, i32
  }
  func.func @transform_1(%arg0: i32) -> (i32, i32) {
    %c0_i32 = arith.constant 0 : i32
    %c0_i32_0 = arith.constant 0 : i32
    %c0_i32_1 = arith.constant 0 : i32
    return %c0_i32, %c0_i32_0 : i32, i32
  }
  func.func @transform_2(%arg0: i32) -> (i32, i32) {
    %c0_i32 = arith.constant 0 : i32
    %c0_i32_0 = arith.constant 0 : i32
    %c0_i32_1 = arith.constant 0 : i32
    return %c0_i32, %c0_i32_0 : i32, i32
  }
  func.func @transform_3(%arg0: i32) -> (i32, i32) {
    %c0_i32 = arith.constant 0 : i32
    %c0_i32_0 = arith.constant 0 : i32
    %c0_i32_1 = arith.constant 0 : i32
    return %c0_i32, %c0_i32_0 : i32, i32
  }
  func.func @transform_4(%arg0: i32) -> (i32, i32) {
    %c0_i32 = arith.constant 0 : i32
    %c0_i32_0 = arith.constant 0 : i32
    %c0_i32_1 = arith.constant 0 : i32
    return %c0_i32, %c0_i32_0 : i32, i32
  }
  func.func @transform_5(%arg0: i32) -> (i32, i32, i32) {
    %c0_i32 = arith.constant 0 : i32
    %c0_i32_0 = arith.constant 0 : i32
    %c0_i32_1 = arith.constant 0 : i32
    return %arg0, %c0_i32, %c0_i32_0 : i32, i32, i32
  }
}

</mosaic_0001>

<llo_original>
// kernel: tpu_custom_call.1
$region0: #{tpu_custom_call.1}
  #allocation0 [shape = 'u32[]', space=smem, size = 0x4, offset = 0x4, fixed_abs, tag = 'smem constant byte address 0x4 - core index']
  #allocation1 [shape = 'u32[72,128]{1,0:T(1,128)}', space=vmem, size = 0x9000, scoped, tag = 'internal scratch']
  %s0 = inlined_call_operand.hbm [shape: bf16[2,8,32], index: 0, kind: input, shape index: {}]
  %s1 = inlined_call_operand.hbm [shape: bf16[32,96], index: 1, kind: input, shape index: {}]
  %s2 = inlined_call_operand.vmem [shape: f32[1,96], index: 2, kind: input, shape index: {}]
  %s3 = inlined_call_operand.hbm [shape: bf16[32,32], index: 3, kind: input, shape index: {}]
  %s4 = inlined_call_operand.vmem [shape: f32[1,32], index: 4, kind: input, shape index: {}]
  %s5 = inlined_call_operand.hbm [shape: f32[2,8,32], index: 5, kind: output, shape index: {}]
  %s6 = sld [smem:[#allocation0]]
  $region65: #{tpu_custom_call.1} parent=0
    _
  %s8 = ssub.s32 1, %s6
  %s9 = scalar_select 0, %s8, %s6
  $region1: #{tpu_custom_call.1} parent=0
    #allocation2 [shape = 'u8[4096]{0}', space=vmem, size = 0x1000, scoped, tag = 'input window, operand 0']
    #allocation3 [shape = 's32[2]{0}', space=sflag, size = 0x8, scoped, tag = 'scoped memory for tpu_custom_call.1']
    #allocation4 [shape = 's32[2]{0}', space=sflag, size = 0x8, scoped, tag = 'scoped memory for tpu_custom_call.1']
    #allocation5 [shape = 'u8[8192]{0}', space=vmem, size = 0x2000, scoped, tag = 'input window, operand 1, single buffered']
    #allocation6 [shape = 's32[1]{0}', space=sflag, size = 0x4, scoped, tag = 'scoped memory for tpu_custom_call.1']
    #allocation7 [shape = 'u8[8192]{0}', space=vmem, size = 0x2000, scoped, tag = 'input window, operand 3, single buffered']
    #allocation8 [shape = 'u8[8192]{0}', space=vmem, size = 0x2000, scoped, tag = 'output window, operand 0']
    %10 = vsyncpa [#allocation3], 0
    %s11 = scalar_lea.sflag [#allocation3], 1
    %12 = vsyncpa %s11, 0
    %13 = vsyncpa [#allocation6], 0
    %14 = vsyncpa [#allocation4], 0
    %s15 = scalar_lea.sflag [#allocation4], 1
    %16 = vsyncpa %s15, 0
    loop: start=0, step=1, limit=4
    $region2: #{tpu_custom_call.1} parent=1 // loop_pre_header
      _
    $region3: #{tpu_custom_call.1} parent=1 // loop_header
      %s18 = sphi 0, %s22
      %p19 = scmp.ge.s32.totalorder %s18, 4
      %s28 = sphi 0, %s30
      %s31 = sphi 0, %s28
      %s32 = sphi 0, %s31
      %s48 = sphi 0, %s32
      %s52 = sphi 0, %s52
      %s54 = sphi 0, %s52
      %s55 = sphi 0, %s54
      %s69 = sphi 0, %s55
      %s73 = sphi 0, %s73
      %s75 = sphi 0, %s73
      %s76 = sphi 0, %s75
      %s90 = sphi 0, %s76
      %s94 = sphi 0, %s94
      %s96 = sphi 0, %s94
      %s97 = sphi 0, %s96
      %s111 = sphi 0, %s97
      %s115 = sphi 0, %s115
      %s117 = sphi 0, %s115
      %s118 = sphi 0, %s117
      %s132 = sphi 0, %s118
      %s138 = sphi 0, %s140
      %s141 = sphi 0, %s138
      %s142 = sphi 0, %s141
      %s158 = sphi 0, %s142
    $region4: #{tpu_custom_call.1} parent=1 // loop_header_branch
      %21 = sbr.rel (%p19) target = $region8
    $region5: #{tpu_custom_call.1} parent=1 // loop_body
      %s23 = ssub.s32 %s18, 1
      %s24 = ssub.s32 %s18, 2
      %s25 = sadd.s32 %s18, 1
      %s26 = ssub.s32 %s18, %s25
      %p27 = scmp.eq.s32.totalorder %s26, 0
      %s29 = sadd.s32 %s28, 1
      %s30 = scalar_select %p27, %s28, %s29
      %p33 = pneg %p27
      %p34 = scmp.eq.s32.totalorder %s18, 1
      %p35 = por %p33, %p34
      %p36 = scmp.ne.s32.totalorder %s28, %s31
      %p37 = scmp.eq.s32.totalorder %s18, 0
      %p38 = por %p36, %p37
      %p39 = scmp.ne.s32.totalorder %s28, %s31
      %p40 = scmp.eq.s32.totalorder %s23, 1
      %p41 = por %p39, %p40
      %p42 = scmp.ne.s32.totalorder %s31, %s32
      %p43 = scmp.eq.s32.totalorder %s23, 0
      %p44 = por %p42, %p43
      %p45 = scmp.ne.s32.totalorder %s31, %s32
      %p46 = scmp.eq.s32.totalorder %s24, 1
      %p47 = por %p45, %p46
      %p49 = scmp.ne.s32.totalorder %s32, %s48
      %p50 = scmp.eq.s32.totalorder %s24, 0
      %p51 = por %p49, %p50
      %s53 = sadd.s32 %s52, 1
      %p56 = scmp.eq.s32.totalorder %s18, 1
      %p57 = scmp.ne.s32.totalorder %s52, %s54
      %p58 = scmp.eq.s32.totalorder %s18, 0
      %p59 = por %p57, %p58
      %p60 = scmp.ne.s32.totalorder %s52, %s54
      %p61 = scmp.eq.s32.totalorder %s23, 1
      %p62 = por %p60, %p61
      %p63 = scmp.ne.s32.totalorder %s54, %s55
      %p64 = scmp.eq.s32.totalorder %s23, 0
      %p65 = por %p63, %p64
      %p66 = scmp.ne.s32.totalorder %s54, %s55
      %p67 = scmp.eq.s32.totalorder %s24, 1
      %p68 = por %p66, %p67
      %p70 = scmp.ne.s32.totalorder %s55, %s69
      %p71 = scmp.eq.s32.totalorder %s24, 0
      %p72 = por %p70, %p71
      %s74 = sadd.s32 %s73, 1
      %p77 = scmp.eq.s32.totalorder %s18, 1
      %p78 = scmp.ne.s32.totalorder %s73, %s75
      %p79 = scmp.eq.s32.totalorder %s18, 0
      %p80 = por %p78, %p79
      %p81 = scmp.ne.s32.totalorder %s73, %s75
      %p82 = scmp.eq.s32.totalorder %s23, 1
      %p83 = por %p81, %p82
      %p84 = scmp.ne.s32.totalorder %s75, %s76
      %p85 = scmp.eq.s32.totalorder %s23, 0
      %p86 = por %p84, %p85
      %p87 = scmp.ne.s32.totalorder %s75, %s76
      %p88 = scmp.eq.s32.totalorder %s24, 1
      %p89 = por %p87, %p88
      %p91 = scmp.ne.s32.totalorder %s76, %s90
      %p92 = scmp.eq.s32.totalorder %s24, 0
      %p93 = por %p91, %p92
      %s95 = sadd.s32 %s94, 1
      %p98 = scmp.eq.s32.totalorder %s18, 1
      %p99 = scmp.ne.s32.totalorder %s94, %s96
      %p100 = scmp.eq.s32.totalorder %s18, 0
      %p101 = por %p99, %p100
      %p102 = scmp.ne.s32.totalorder %s94, %s96
      %p103 = scmp.eq.s32.totalorder %s23, 1
      %p104 = por %p102, %p103
      %p105 = scmp.ne.s32.totalorder %s96, %s97
      %p106 = scmp.eq.s32.totalorder %s23, 0
      %p107 = por %p105, %p106
      %p108 = scmp.ne.s32.totalorder %s96, %s97
      %p109 = scmp.eq.s32.totalorder %s24, 1
      %p110 = por %p108, %p109
      %p112 = scmp.ne.s32.totalorder %s97, %s111
      %p113 = scmp.eq.s32.totalorder %s24, 0
      %p114 = por %p112, %p113
      %s116 = sadd.s32 %s115, 1
      %p119 = scmp.eq.s32.totalorder %s18, 1
      %p120 = scmp.ne.s32.totalorder %s115, %s117
      %p121 = scmp.eq.s32.totalorder %s18, 0
      %p122 = por %p120, %p121
      %p123 = scmp.ne.s32.totalorder %s115, %s117
      %p124 = scmp.eq.s32.totalorder %s23, 1
      %p125 = por %p123, %p124
      %p126 = scmp.ne.s32.totalorder %s117, %s118
      %p127 = scmp.eq.s32.totalorder %s23, 0
      %p128 = por %p126, %p127
      %p129 = scmp.ne.s32.totalorder %s117, %s118
      %p130 = scmp.eq.s32.totalorder %s24, 1
      %p131 = por %p129, %p130
      %p133 = scmp.ne.s32.totalorder %s118, %s132
      %p134 = scmp.eq.s32.totalorder %s24, 0
      %p135 = por %p133, %p134
      %s136 = ssub.s32 %s18, %s25
      %p137 = scmp.eq.s32.totalorder %s136, 0
      %s139 = sadd.s32 %s138, 1
      %s140 = scalar_select %p137, %s138, %s139
      %p143 = pneg %p137
      %p144 = scmp.eq.s32.totalorder %s18, 1
      %p145 = por %p143, %p144
      %p146 = scmp.ne.s32.totalorder %s138, %s141
      %p147 = scmp.eq.s32.totalorder %s18, 0
      %p148 = por %p146, %p147
      %p149 = scmp.ne.s32.totalorder %s138, %s141
      %p150 = scmp.eq.s32.totalorder %s23, 1
      %p151 = por %p149, %p150
      %p152 = scmp.ne.s32.totalorder %s141, %s142
      %p153 = scmp.eq.s32.totalorder %s23, 0
      %p154 = por %p152, %p153
      %p155 = scmp.ne.s32.totalorder %s141, %s142
      %p156 = scmp.eq.s32.totalorder %s24, 1
      %p157 = por %p155, %p156
      %p159 = scmp.ne.s32.totalorder %s142, %s158
      %p160 = scmp.eq.s32.totalorder %s24, 0
      %p161 = por %p159, %p160
      %p162 = scmp.le.s32.totalorder 1, %s18
      %p163 = scmp.lt.s32.totalorder %s18, 3
      %p164 = pnand %p162, %p163
      %p165 = pneg %p164
      // Predicated region
      $region9: #{tpu_custom_call.1} parent=5 // pred_check
        _
      $region10: #{tpu_custom_call.1} parent=5 // pred_check_branch
        %167 = sbr.rel (%p164) target = $region12
      $region11: #{tpu_custom_call.1} parent=5 // pred_region
        %s168 = ssub.s32 %s18, 1
        // Predicated region
        $region13: #{tpu_custom_call.1} parent=11 // pred_check
          %p169 = pneg %p65
        $region14: #{tpu_custom_call.1} parent=11 // pred_check_branch
          %171 = sbr.rel (%p169) target = $region16
        $region15: #{tpu_custom_call.1} parent=11 // pred_region
          %173 = vsyncadd [#allocation6], 0
          %s174 = sshll.u32 %s1, 4
          %s175 = int_to_ptr.hbm [resolvable:$true] %s174
          %s176 = sshll.u32 [#allocation5], 4
          %s177 = int_to_ptr.vmem [resolvable:$true] %s176
          %182 = dma.hbm_to_vmem [thread:$0]  %s175, 256, %s177, [#allocation6], 64, 64, 4
        $region16: #{tpu_custom_call.1} parent=11 // pred_fallthru
          _
        // Predicated region
        $region17: #{tpu_custom_call.1} parent=11 // pred_check
          %p183 = pneg %p86
        $region18: #{tpu_custom_call.1} parent=11 // pred_check_branch
          %185 = sbr.rel (%p183) target = $region20
        $region19: #{tpu_custom_call.1} parent=11 // pred_region
          _
        $region20: #{tpu_custom_call.1} parent=11 // pred_fallthru
          _
        // Predicated region
        $region21: #{tpu_custom_call.1} parent=11 // pred_check
          %p186 = pneg %p107
        $region22: #{tpu_custom_call.1} parent=11 // pred_check_branch
          %188 = sbr.rel (%p186) target = $region24
        $region23: #{tpu_custom_call.1} parent=11 // pred_region
          %190 = vsyncadd [#allocation6], 0
          %s191 = sshll.u32 %s3, 4
          %s192 = int_to_ptr.hbm [resolvable:$true] %s191
          %s193 = sshll.u32 [#allocation7], 4
          %s194 = int_to_ptr.vmem [resolvable:$true] %s193
          %199 = dma.hbm_to_vmem [thread:$0]  %s192, 256, %s194, [#allocation6], 64, 64, 4
        $region24: #{tpu_custom_call.1} parent=11 // pred_fallthru
          _
        // Predicated region
        $region25: #{tpu_custom_call.1} parent=11 // pred_check
          %p200 = pneg %p128
        $region26: #{tpu_custom_call.1} parent=11 // pred_check_branch
          %202 = sbr.rel (%p200) target = $region28
        $region27: #{tpu_custom_call.1} parent=11 // pred_region
          _
        $region28: #{tpu_custom_call.1} parent=11 // pred_fallthru
          _
      $region12: #{tpu_custom_call.1} parent=5 // pred_fallthru
        _
      %p203 = scmp.lt.s32.totalorder %s18, 2
      // Predicated region
      $region29: #{tpu_custom_call.1} parent=5 // pred_check
        %p204 = pneg %p203
      $region30: #{tpu_custom_call.1} parent=5 // pred_check_branch
        %206 = sbr.rel (%p204) target = $region32
      $region31: #{tpu_custom_call.1} parent=5 // pred_region
        // Predicated region
        $region33: #{tpu_custom_call.1} parent=31 // pred_check
          %p207 = pneg %p38
        $region34: #{tpu_custom_call.1} parent=31 // pred_check_branch
          %209 = sbr.rel (%p207) target = $region36
        $region35: #{tpu_custom_call.1} parent=31 // pred_region
          %s210 = sand.u32 %s28, 1
          %s211 = scalar_lea.sflag [#allocation3], %s210
          %s212 = sand.u32 %s28, 1
          %s213 = smul.addr %s212, 4
          %s214 = scalar_lea.vmem [#allocation2], %s213
          %216 = vsyncadd %s211, 0
          %s217 = smul.addr %s18, 4
          %s218 = scalar_lea.hbm %s0, %s217
          %s220 = sshll.u32 %s218, 4
          %s221 = int_to_ptr.hbm [resolvable:$true] %s220
          %s222 = sshll.u32 %s214, 4
          %s223 = int_to_ptr.vmem [resolvable:$true] %s222
          %225 = dma.hbm_to_vmem [thread:$0]  %s221, 64, %s223, %s211
        $region36: #{tpu_custom_call.1} parent=31 // pred_fallthru
          _
      $region32: #{tpu_custom_call.1} parent=5 // pred_fallthru
        _
      %p226 = scmp.le.s32.totalorder 1, %s18
      %p227 = scmp.lt.s32.totalorder %s18, 3
      %p228 = pnand %p226, %p227
      %p229 = pneg %p228
      // Predicated region
      $region37: #{tpu_custom_call.1} parent=5 // pred_check
        _
      $region38: #{tpu_custom_call.1} parent=5 // pred_check_branch
        %231 = sbr.rel (%p228) target = $region40
      $region39: #{tpu_custom_call.1} parent=5 // pred_region
        %s232 = ssub.s32 %s18, 1
        %s233 = sand.u32 %s31, 1
        %s234 = scalar_lea.sflag [#allocation3], %s233
        %s235 = sand.u32 %s31, 1
        %s236 = smul.addr %s235, 4
        %s237 = scalar_lea.vmem [#allocation2], %s236
        // Predicated region
        $region41: #{tpu_custom_call.1} parent=39 // pred_check
          %p238 = pneg %p44
        $region42: #{tpu_custom_call.1} parent=39 // pred_check_branch
          %240 = sbr.rel (%p238) target = $region44
        $region43: #{tpu_custom_call.1} parent=39 // pred_region
          %242 = dma.done %s234, 64
        $region44: #{tpu_custom_call.1} parent=39 // pred_fallthru
          _
        // Predicated region
        $region45: #{tpu_custom_call.1} parent=39 // pred_check
          %p243 = pneg %p65
        $region46: #{tpu_custom_call.1} parent=39 // pred_check_branch
          %245 = sbr.rel (%p243) target = $region48
        $region47: #{tpu_custom_call.1} parent=39 // pred_region
          %247 = dma.done [#allocation6], 256
        $region48: #{tpu_custom_call.1} parent=39 // pred_fallthru
          _
        // Predicated region
        $region49: #{tpu_custom_call.1} parent=39 // pred_check
          %p248 = pneg %p107
        $region50: #{tpu_custom_call.1} parent=39 // pred_check_branch
          %250 = sbr.rel (%p248) target = $region52
        $region51: #{tpu_custom_call.1} parent=39 // pred_region
          %252 = dma.done [#allocation6], 256
        $region52: #{tpu_custom_call.1} parent=39 // pred_fallthru
          _
        %s253 = sand.u32 %s31, 1
        %s254 = scalar_lea.sflag [#allocation3], %s253
        %s255 = sand.u32 %s31, 1
        %s256 = smul.addr %s255, 4
        %s257 = scalar_lea.vmem [#allocation2], %s256
        %p258 = pneg %p44
        %p259 = pneg %p41
        %p260 = pneg %p65
        %p261 = pneg %p62
        %p262 = pneg %p86
        %p263 = pneg %p83
        %p264 = pneg %p107
        %p265 = pneg %p104
        %p266 = pneg %p128
        %p267 = pneg %p125
        %p268 = pneg %p154
        %p269 = pneg %p151
        %s270 = sand.u32 %s141, 1
        %s271 = scalar_lea.sflag [#allocation4], %s270
        %s272 = sand.u32 %s141, 1
        %s273 = smul.addr %s272, 8
        %s274 = scalar_lea.vmem [#allocation8], %s273
        %v276 = vld [vmem:[%s237] sm:$0xf]
        %v277 = vld [vmem:[#allocation5] sm:$0xf]
        %v278 = vld [vmem:[#allocation5 + $0x4] sm:$0xf]
        %v279 = vld [vmem:[#allocation5 + $0x8] sm:$0xf]
        %v280 = vld [vmem:[#allocation5 + $0xc] sm:$0xf]
        %v281 = vld [vmem:[%s2] sm:$0x1]
        %v283 = vperm.slane %v281, 0
        %v289 = vunpack.c.l.b16 %v277
        %v290 = vunpack.c.l.b16 %v278
        %v291 = vunpack.c.l.b16 %v279
        %v292 = vunpack.c.l.b16 %v280
        %v293 = vpack.c.b16 %v290, %v289
        %v294 = vpack.c.b16 %v292, %v291
        %vm297 = vcmask 261120
        %v299 = vsel %vm297, %v276, 0
        %301 = vmatpush.bf16.msra.mxu0 0
        %302 = vmatpush.bf16.msra.mxu0 0
        %303 = vmatpush.bf16.msra.mxu0 0
        %304 = vmatpush.bf16.msra.mxu0 0
        %305 = vmatpush.bf16.msra.mxu0 0
        %306 = vmatpush.bf16.msra.mxu0 0
        %307 = vmatpush.bf16.msra.mxu0 %v294
        %308 = vmatpush.bf16.msra.mxu0 %v293
        %309 = vmatmul.bf16.gmra.mxu0 %v299
        %v310 = vpop.f32.mrf.mxu0
        %v311 = vadd.f32 %v283, %v310
        %v312 = vpop.f32.mrf.mxu0
        %313 = vdwg.mxu0
        %v314 = vpack.c.bf16 %v311, %v311
        %316 = vrot.lane.b32.xlu0 %v314, 120
        %v317 = vpop.permute.xlu0 %316
        %318 = vrot.lane.b32.xlu0 %v314, 112
        %v319 = vpop.permute.xlu0 %318
        %320 = vrot.lane.b32.xlu0 %v314, 104
        %v321 = vpop.permute.xlu0 %320
        %v324 = vpack.i.b16 %v317, %v314
        %v325 = vshrl.u32 %v314, 16
        %v326 = vshrl.u32 %v317, 16
        %v327 = vpack.i.b16 %v326, %v325
        %v330 = vpack.i.b16 %v321, %v319
        %v331 = vshrl.u32 %v319, 16
        %v332 = vshrl.u32 %v321, 16
        %v333 = vpack.i.b16 %v332, %v331
        %v336 = vunpack.c.l.s4 1983009808
        %v337 = vunpack.c.0.s8 %v336
        %v338 = vperm.slane %v324, %v337
        %v341 = vunpack.c.l.s4 1983009808
        %v342 = vunpack.c.0.s8 %v341
        %v343 = vperm.slane %v330, %v342
        %v344 = vrot.slane %v343, 4
        %vm345 = vcmask 1047556
        %v346 = vsel %vm345, %v344, %v338
        %v347 = vrot.slane %v338, 4
        %v348 = vsel %vm345, %v343, %v347
        %v350 = vunpack.c.l.s4 1934713408
        %v351 = vunpack.c.0.s8 %v350
        %v352 = vperm.slane %v346, %v351
        %v354 = vunpack.c.l.s4 1934713408
        %v355 = vunpack.c.0.s8 %v354
        %v356 = vperm.slane %v348, %v355
        %v357 = vrot.slane %v352, 4
        %v358 = vsel %vm345, 0, %v357
        %v359 = vrot.slane %v356, 4
        %v360 = vsel %vm345, 0, %v359
        %v363 = vunpack.c.l.s4 1983009808
        %v364 = vunpack.c.0.s8 %v363
        %v365 = vperm.slane %v327, %v364
        %v368 = vunpack.c.l.s4 1983009808
        %v369 = vunpack.c.0.s8 %v368
        %v370 = vperm.slane %v333, %v369
        %v371 = vrot.slane %v370, 4
        %v372 = vsel %vm345, %v371, %v365
        %v373 = vrot.slane %v365, 4
        %v374 = vsel %vm345, %v370, %v373
        %v376 = vunpack.c.l.s4 1934713408
        %v377 = vunpack.c.0.s8 %v376
        %v378 = vperm.slane %v372, %v377
        %v380 = vunpack.c.l.s4 1934713408
        %v381 = vunpack.c.0.s8 %v380
        %v382 = vperm.slane %v374, %v381
        %v383 = vrot.slane %v378, 4
        %v384 = vsel %vm345, 0, %v383
        %v385 = vrot.slane %v382, 4
        %v386 = vsel %vm345, 0, %v385
        %v387 = vsel %vm345, %v359, %v352
        %v389 = vunpack.c.l.s4 1983009808
        %v390 = vunpack.c.0.s8 %v389
        %v391 = vperm.slane %v387, %v390
        %v392 = vrot.slane %v360, 4
        %v393 = vsel %vm345, %v392, %v358
        %v395 = vunpack.c.l.s4 1983009808
        %v396 = vunpack.c.0.s8 %v395
        %v397 = vperm.slane %v393, %v396
        %v398 = vrot.slane %v397, 4
        %v399 = vsel %vm345, %v398, %v391
        %v401 = vunpack.c.l.s4 1934713408
        %v402 = vunpack.c.0.s8 %v401
        %v403 = vperm.slane %v399, %v402
        %v404 = vrot.slane %v403, 4
        %v405 = vsel %vm345, 0, %v404
        %v406 = vsel %vm345, %v385, %v378
        %v408 = vunpack.c.l.s4 1983009808
        %v409 = vunpack.c.0.s8 %v408
        %v410 = vperm.slane %v406, %v409
        %v411 = vrot.slane %v386, 4
        %v412 = vsel %vm345, %v411, %v384
        %v414 = vunpack.c.l.s4 1983009808
        %v415 = vunpack.c.0.s8 %v414
        %v416 = vperm.slane %v412, %v415
        %v417 = vrot.slane %v416, 4
        %v418 = vsel %vm345, %v417, %v410
        %v420 = vunpack.c.l.s4 1934713408
        %v421 = vunpack.c.0.s8 %v420
        %v422 = vperm.slane %v418, %v421
        %v423 = vrot.slane %v422, 4
        %v424 = vsel %vm345, 0, %v423
        %v427 = vpack.i.b16 %v422, %v403
        %v428 = vshrl.u32 %v403, 16
        %v429 = vshrl.u32 %v422, 16
        %v430 = vpack.i.b16 %v429, %v428
        %v433 = vpack.i.b16 %v424, %v405
        %v434 = vshrl.u32 %v405, 16
        %v435 = vshrl.u32 %v424, 16
        %v436 = vpack.i.b16 %v435, %v434
        %437 = vrot.lane.b32.xlu0 %v314, 96
        %v438 = vpop.permute.xlu0 %437
        %439 = vrot.lane.b32.xlu0 %v317, 96
        %v440 = vpop.permute.xlu0 %439
        %441 = vrot.lane.b32.xlu0 %v319, 96
        %v442 = vpop.permute.xlu0 %441
        %443 = vrot.lane.b32.xlu0 %v321, 96
        %v444 = vpop.permute.xlu0 %443
        %v447 = vpack.i.b16 %v440, %v438
        %v448 = vshrl.u32 %v438, 16
        %v449 = vshrl.u32 %v440, 16
        %v450 = vpack.i.b16 %v449, %v448
        %v453 = vpack.i.b16 %v444, %v442
        %v454 = vshrl.u32 %v442, 16
        %v455 = vshrl.u32 %v444, 16
        %v456 = vpack.i.b16 %v455, %v454
        %v459 = vunpack.c.l.s4 1983009808
        %v460 = vunpack.c.0.s8 %v459
        %v461 = vperm.slane %v447, %v460
        %v464 = vunpack.c.l.s4 1983009808
        %v465 = vunpack.c.0.s8 %v464
        %v466 = vperm.slane %v453, %v465
        %v467 = vrot.slane %v466, 4
        %v468 = vsel %vm345, %v467, %v461
        %v469 = vrot.slane %v461, 4
        %v470 = vsel %vm345, %v466, %v469
        %v472 = vunpack.c.l.s4 1934713408
        %v473 = vunpack.c.0.s8 %v472
        %v474 = vperm.slane %v468, %v473
        %v476 = vunpack.c.l.s4 1934713408
        %v477 = vunpack.c.0.s8 %v476
        %v478 = vperm.slane %v470, %v477
        %v479 = vrot.slane %v474, 4
        %v480 = vsel %vm345, 0, %v479
        %v481 = vrot.slane %v478, 4
        %v482 = vsel %vm345, 0, %v481
        %v485 = vunpack.c.l.s4 1983009808
        %v486 = vunpack.c.0.s8 %v485
        %v487 = vperm.slane %v450, %v486
        %v490 = vunpack.c.l.s4 1983009808
        %v491 = vunpack.c.0.s8 %v490
        %v492 = vperm.slane %v456, %v491
        %v493 = vrot.slane %v492, 4
        %v494 = vsel %vm345, %v493, %v487
        %v495 = vrot.slane %v487, 4
        %v496 = vsel %vm345, %v492, %v495
        %v498 = vunpack.c.l.s4 1934713408
        %v499 = vunpack.c.0.s8 %v498
        %v500 = vperm.slane %v494, %v499
        %v502 = vunpack.c.l.s4 1934713408
        %v503 = vunpack.c.0.s8 %v502
        %v504 = vperm.slane %v496, %v503
        %v505 = vrot.slane %v500, 4
        %v506 = vsel %vm345, 0, %v505
        %v507 = vrot.slane %v504, 4
        %v508 = vsel %vm345, 0, %v507
        %v509 = vsel %vm345, %v481, %v474
        %v511 = vunpack.c.l.s4 1983009808
        %v512 = vunpack.c.0.s8 %v511
        %v513 = vperm.slane %v509, %v512
        %v514 = vrot.slane %v482, 4
        %v515 = vsel %vm345, %v514, %v480
        %v517 = vunpack.c.l.s4 1983009808
        %v518 = vunpack.c.0.s8 %v517
        %v519 = vperm.slane %v515, %v518
        %v520 = vrot.slane %v519, 4
        %v521 = vsel %vm345, %v520, %v513
        %v523 = vunpack.c.l.s4 1934713408
        %v524 = vunpack.c.0.s8 %v523
        %v525 = vperm.slane %v521, %v524
        %v526 = vrot.slane %v525, 4
        %v527 = vsel %vm345, 0, %v526
        %v528 = vsel %vm345, %v507, %v500
        %v530 = vunpack.c.l.s4 1983009808
        %v531 = vunpack.c.0.s8 %v530
        %v532 = vperm.slane %v528, %v531
        %v533 = vrot.slane %v508, 4
        %v534 = vsel %vm345, %v533, %v506
        %v536 = vunpack.c.l.s4 1983009808
        %v537 = vunpack.c.0.s8 %v536
        %v538 = vperm.slane %v534, %v537
        %v539 = vrot.slane %v538, 4
        %v540 = vsel %vm345, %v539, %v532
        %v542 = vunpack.c.l.s4 1934713408
        %v543 = vunpack.c.0.s8 %v542
        %v544 = vperm.slane %v540, %v543
        %v545 = vrot.slane %v544, 4
        %v546 = vsel %vm345, 0, %v545
        %v549 = vpack.i.b16 %v544, %v525
        %v550 = vshrl.u32 %v525, 16
        %v551 = vshrl.u32 %v544, 16
        %v552 = vpack.i.b16 %v551, %v550
        %v555 = vpack.i.b16 %v546, %v527
        %v556 = vshrl.u32 %v527, 16
        %v557 = vshrl.u32 %v546, 16
        %v558 = vpack.i.b16 %v557, %v556
        %559 = vrot.lane.b32.xlu0 %v314, 64
        %v560 = vpop.permute.xlu0 %559
        %561 = vrot.lane.b32.xlu0 %v317, 64
        %v562 = vpop.permute.xlu0 %561
        %563 = vrot.lane.b32.xlu0 %v319, 64
        %v564 = vpop.permute.xlu0 %563
        %565 = vrot.lane.b32.xlu0 %v321, 64
        %v566 = vpop.permute.xlu0 %565
        %v569 = vpack.i.b16 %v562, %v560
        %v570 = vshrl.u32 %v560, 16
        %v571 = vshrl.u32 %v562, 16
        %v572 = vpack.i.b16 %v571, %v570
        %v575 = vpack.i.b16 %v566, %v564
        %v576 = vshrl.u32 %v564, 16
        %v577 = vshrl.u32 %v566, 16
        %v578 = vpack.i.b16 %v577, %v576
        %v581 = vunpack.c.l.s4 1983009808
        %v582 = vunpack.c.0.s8 %v581
        %v583 = vperm.slane %v569, %v582
        %v586 = vunpack.c.l.s4 1983009808
        %v587 = vunpack.c.0.s8 %v586
        %v588 = vperm.slane %v575, %v587
        %v589 = vrot.slane %v588, 4
        %v590 = vsel %vm345, %v589, %v583
        %v591 = vrot.slane %v583, 4
        %v592 = vsel %vm345, %v588, %v591
        %v594 = vunpack.c.l.s4 1934713408
        %v595 = vunpack.c.0.s8 %v594
        %v596 = vperm.slane %v590, %v595
        %v598 = vunpack.c.l.s4 1934713408
        %v599 = vunpack.c.0.s8 %v598
        %v600 = vperm.slane %v592, %v599
        %v601 = vrot.slane %v596, 4
        %v602 = vsel %vm345, 0, %v601
        %v603 = vrot.slane %v600, 4
        %v604 = vsel %vm345, 0, %v603
        %v607 = vunpack.c.l.s4 1983009808
        %v608 = vunpack.c.0.s8 %v607
        %v609 = vperm.slane %v572, %v608
        %v612 = vunpack.c.l.s4 1983009808
        %v613 = vunpack.c.0.s8 %v612
        %v614 = vperm.slane %v578, %v613
        %v615 = vrot.slane %v614, 4
        %v616 = vsel %vm345, %v615, %v609
        %v617 = vrot.slane %v609, 4
        %v618 = vsel %vm345, %v614, %v617
        %v620 = vunpack.c.l.s4 1934713408
        %v621 = vunpack.c.0.s8 %v620
        %v622 = vperm.slane %v616, %v621
        %v624 = vunpack.c.l.s4 1934713408
        %v625 = vunpack.c.0.s8 %v624
        %v626 = vperm.slane %v618, %v625
        %v627 = vrot.slane %v622, 4
        %v628 = vsel %vm345, 0, %v627
        %v629 = vrot.slane %v626, 4
        %v630 = vsel %vm345, 0, %v629
        %v631 = vsel %vm345, %v603, %v596
        %v633 = vunpack.c.l.s4 1983009808
        %v634 = vunpack.c.0.s8 %v633
        %v635 = vperm.slane %v631, %v634
        %v636 = vrot.slane %v604, 4
        %v637 = vsel %vm345, %v636, %v602
        %v639 = vunpack.c.l.s4 1983009808
        %v640 = vunpack.c.0.s8 %v639
        %v641 = vperm.slane %v637, %v640
        %v642 = vrot.slane %v641, 4
        %v643 = vsel %vm345, %v642, %v635
        %v645 = vunpack.c.l.s4 1934713408
        %v646 = vunpack.c.0.s8 %v645
        %v647 = vperm.slane %v643, %v646
        %v648 = vrot.slane %v647, 4
        %v649 = vsel %vm345, 0, %v648
        %v650 = vsel %vm345, %v629, %v622
        %v652 = vunpack.c.l.s4 1983009808
        %v653 = vunpack.c.0.s8 %v652
        %v654 = vperm.slane %v650, %v653
        %v655 = vrot.slane %v630, 4
        %v656 = vsel %vm345, %v655, %v628
        %v658 = vunpack.c.l.s4 1983009808
        %v659 = vunpack.c.0.s8 %v658
        %v660 = vperm.slane %v656, %v659
        %v661 = vrot.slane %v660, 4
        %v662 = vsel %vm345, %v661, %v654
        %v664 = vunpack.c.l.s4 1934713408
        %v665 = vunpack.c.0.s8 %v664
        %v666 = vperm.slane %v662, %v665
        %v667 = vrot.slane %v666, 4
        %v668 = vsel %vm345, 0, %v667
        %v671 = vpack.i.b16 %v666, %v647
        %v672 = vshrl.u32 %v647, 16
        %v673 = vshrl.u32 %v666, 16
        %v674 = vpack.i.b16 %v673, %v672
        %v677 = vpack.i.b16 %v668, %v649
        %v678 = vshrl.u32 %v649, 16
        %v679 = vshrl.u32 %v668, 16
        %v680 = vpack.i.b16 %v679, %v678
        %vm681 = vcmask 64512
        %v683 = vsel %vm681, %v427, 0
        %v686 = vsel %vm681, %v549, 0
        %688 = vmatpush.bf16.xpose.msra.mxu0 0
        %689 = vmatpush.bf16.xpose.msra.mxu0 0
        %690 = vmatpush.bf16.xpose.msra.mxu0 0
        %691 = vmatpush.bf16.xpose.msra.mxu0 0
        %692 = vmatpush.bf16.xpose.msra.mxu0 0
        %693 = vmatpush.bf16.xpose.msra.mxu0 0
        %694 = vmatpush.bf16.xpose.msra.mxu0 0
        %695 = vmatpush.bf16.xpose.msra.mxu0 %v686
        %696 = vmatmul.bf16.gmra.mxu0 %v683
        %v697 = vpop.f32.mrf.mxu0
        %v698 = vadd.f32 0.0, %v697
        %v699 = vpop.f32.mrf.mxu0
        %700 = vdwg.mxu0
        %v702 = vsel %vm681, %v430, 0
        %v705 = vsel %vm681, %v552, 0
        %707 = vmatpush.bf16.xpose.msra.mxu0 0
        %708 = vmatpush.bf16.xpose.msra.mxu0 0
        %709 = vmatpush.bf16.xpose.msra.mxu0 0
        %710 = vmatpush.bf16.xpose.msra.mxu0 0
        %711 = vmatpush.bf16.xpose.msra.mxu0 0
        %712 = vmatpush.bf16.xpose.msra.mxu0 0
        %713 = vmatpush.bf16.xpose.msra.mxu0 0
        %714 = vmatpush.bf16.xpose.msra.mxu0 %v705
        %715 = vmatmul.bf16.gmra.mxu0 %v702
        %v716 = vpop.f32.mrf.mxu0
        %v717 = vadd.f32 0.0, %v716
        %v718 = vpop.f32.mrf.mxu0
        %719 = vdwg.mxu0
        %v721 = vsel %vm681, %v433, 0
        %v724 = vsel %vm681, %v555, 0
        %726 = vmatpush.bf16.xpose.msra.mxu0 0
        %727 = vmatpush.bf16.xpose.msra.mxu0 0
        %728 = vmatpush.bf16.xpose.msra.mxu0 0
        %729 = vmatpush.bf16.xpose.msra.mxu0 0
        %730 = vmatpush.bf16.xpose.msra.mxu0 0
        %731 = vmatpush.bf16.xpose.msra.mxu0 0
        %732 = vmatpush.bf16.xpose.msra.mxu0 0
        %733 = vmatpush.bf16.xpose.msra.mxu0 %v724
        %734 = vmatmul.bf16.gmra.mxu0 %v721
        %v735 = vpop.f32.mrf.mxu0
        %v736 = vadd.f32 0.0, %v735
        %v737 = vpop.f32.mrf.mxu0
        %738 = vdwg.mxu0
        %v740 = vsel %vm681, %v436, 0
        %v743 = vsel %vm681, %v558, 0
        %745 = vmatpush.bf16.xpose.msra.mxu0 0
        %746 = vmatpush.bf16.xpose.msra.mxu0 0
        %747 = vmatpush.bf16.xpose.msra.mxu0 0
        %748 = vmatpush.bf16.xpose.msra.mxu0 0
        %749 = vmatpush.bf16.xpose.msra.mxu0 0
        %750 = vmatpush.bf16.xpose.msra.mxu0 0
        %751 = vmatpush.bf16.xpose.msra.mxu0 0
        %752 = vmatpush.bf16.xpose.msra.mxu0 %v743
        %753 = vmatmul.bf16.gmra.mxu0 %v740
        %v754 = vpop.f32.mrf.mxu0
        %v755 = vadd.f32 0.0, %v754
        %v756 = vpop.f32.mrf.mxu0
        %757 = vdwg.mxu0
        %v758 = vsel %vm681, %v698, -inf
        %759 = vmax.xlane.f32.xlu0 %v758
        %v760 = vpop.xlane.xlu0 %759
        %v761 = vsel %vm681, %v717, -inf
        %762 = vmax.xlane.f32.xlu0 %v761
        %v763 = vpop.xlane.xlu0 %762
        %v764 = vsel %vm681, %v736, -inf
        %765 = vmax.xlane.f32.xlu0 %v764
        %v766 = vpop.xlane.xlu0 %765
        %v767 = vsel %vm681, %v755, -inf
        %768 = vmax.xlane.f32.xlu0 %v767
        %v769 = vpop.xlane.xlu0 %768
        %v770 = vsub.f32 %v698, %v760
        %v771 = vsub.f32 %v717, %v763
        %v772 = vsub.f32 %v736, %v766
        %v773 = vsub.f32 %v755, %v769
        %v774 = vmul.f32 %v770, 1.442695
        %v775 = vpow.pop %v774
        %v776 = vmul.f32 %v771, 1.442695
        %v777 = vpow.pop %v776
        %v778 = vmul.f32 %v772, 1.442695
        %v779 = vpow.pop %v778
        %v780 = vmul.f32 %v773, 1.442695
        %v781 = vpow.pop %v780
        %v782 = vsel %vm681, %v775, 0.0
        %783 = vadd.xlane.f32.xlu0 %v782
        %v784 = vpop.xlane.xlu0 %783
        %v785 = vsel %vm681, %v777, 0.0
        %786 = vadd.xlane.f32.xlu0 %v785
        %v787 = vpop.xlane.xlu0 %786
        %v788 = vsel %vm681, %v779, 0.0
        %789 = vadd.xlane.f32.xlu0 %v788
        %v790 = vpop.xlane.xlu0 %789
        %v791 = vsel %vm681, %v781, 0.0
        %792 = vadd.xlane.f32.xlu0 %v791
        %v793 = vpop.xlane.xlu0 %792
        %v794 = vrcp.pop %v784
        %v795 = vrcp.pop %v787
        %v796 = vrcp.pop %v790
        %v797 = vrcp.pop %v793
        %v798 = vmul.f32 %v775, %v794
        %v799 = vmul.f32 %v777, %v795
        %v800 = vmul.f32 %v779, %v796
        %v801 = vmul.f32 %v781, %v797
        %v802 = vpack.c.bf16 %v798, %v798
        %v803 = vpack.c.bf16 %v799, %v799
        %v804 = vpack.c.bf16 %v800, %v800
        %v805 = vpack.c.bf16 %v801, %v801
        %v807 = vsel %vm681, %v802, 0
        %vm809 = vcmask 1043456
        %v811 = vsel %vm809, %v671, 0
        %813 = vmatpush.bf16.msra.mxu0 0
        %814 = vmatpush.bf16.msra.mxu0 0
        %815 = vmatpush.bf16.msra.mxu0 0
        %816 = vmatpush.bf16.msra.mxu0 0
        %817 = vmatpush.bf16.msra.mxu0 0
        %818 = vmatpush.bf16.msra.mxu0 0
        %819 = vmatpush.bf16.msra.mxu0 0
        %820 = vmatpush.bf16.msra.mxu0 %v811
        %821 = vmatmul.bf16.gmra.mxu0 %v807
        %v822 = vpop.f32.mrf.mxu0
        %v823 = vadd.f32 0.0, %v822
        %v824 = vpop.f32.mrf.mxu0
        %825 = vdwg.mxu0
        %v827 = vsel %vm681, %v803, 0
        %v830 = vsel %vm809, %v674, 0
        %832 = vmatpush.bf16.msra.mxu0 0
        %833 = vmatpush.bf16.msra.mxu0 0
        %834 = vmatpush.bf16.msra.mxu0 0
        %835 = vmatpush.bf16.msra.mxu0 0
        %836 = vmatpush.bf16.msra.mxu0 0
        %837 = vmatpush.bf16.msra.mxu0 0
        %838 = vmatpush.bf16.msra.mxu0 0
        %839 = vmatpush.bf16.msra.mxu0 %v830
        %840 = vmatmul.bf16.gmra.mxu0 %v827
        %v841 = vpop.f32.mrf.mxu0
        %v842 = vadd.f32 0.0, %v841
        %v843 = vpop.f32.mrf.mxu0
        %844 = vdwg.mxu0
        %v846 = vsel %vm681, %v804, 0
        %v849 = vsel %vm809, %v677, 0
        %851 = vmatpush.bf16.msra.mxu0 0
        %852 = vmatpush.bf16.msra.mxu0 0
        %853 = vmatpush.bf16.msra.mxu0 0
        %854 = vmatpush.bf16.msra.mxu0 0
        %855 = vmatpush.bf16.msra.mxu0 0
        %856 = vmatpush.bf16.msra.mxu0 0
        %857 = vmatpush.bf16.msra.mxu0 0
        %858 = vmatpush.bf16.msra.mxu0 %v849
        %859 = vmatmul.bf16.gmra.mxu0 %v846
        %v860 = vpop.f32.mrf.mxu0
        %v861 = vadd.f32 0.0, %v860
        %v862 = vpop.f32.mrf.mxu0
        %863 = vdwg.mxu0
        %v865 = vsel %vm681, %v805, 0
        %v868 = vsel %vm809, %v680, 0
        %870 = vmatpush.bf16.msra.mxu0 0
        %871 = vmatpush.bf16.msra.mxu0 0
        %872 = vmatpush.bf16.msra.mxu0 0
        %873 = vmatpush.bf16.msra.mxu0 0
        %874 = vmatpush.bf16.msra.mxu0 0
        %875 = vmatpush.bf16.msra.mxu0 0
        %876 = vmatpush.bf16.msra.mxu0 0
        %877 = vmatpush.bf16.msra.mxu0 %v868
        %878 = vmatmul.bf16.gmra.mxu0 %v865
        %v879 = vpop.f32.mrf.mxu0
        %v880 = vadd.f32 0.0, %v879
        %v881 = vpop.f32.mrf.mxu0
        %882 = vdwg.mxu0
        %v883 = vrot.slane %v861, 4
        %vm884 = vcmask 1047556
        %v885 = vsel %vm884, %v883, %v823
        %v886 = vrot.slane %v823, 4
        %v887 = vsel %vm884, %v861, %v886
        %v889 = vunpack.c.l.s4 1983009808
        %v890 = vunpack.c.0.s8 %v889
        %v891 = vperm.slane %v885, %v890
        %v893 = vunpack.c.l.s4 1983009808
        %v894 = vunpack.c.0.s8 %v893
        %v895 = vperm.slane %v887, %v894
        %v896 = vrot.slane %v880, 4
        %v897 = vsel %vm884, %v896, %v842
        %v898 = vrot.slane %v842, 4
        %v899 = vsel %vm884, %v880, %v898
        %v901 = vunpack.c.l.s4 1983009808
        %v902 = vunpack.c.0.s8 %v901
        %v903 = vperm.slane %v897, %v902
        %v905 = vunpack.c.l.s4 1983009808
        %v906 = vunpack.c.0.s8 %v905
        %v907 = vperm.slane %v899, %v906
        %v908 = vrot.slane %v903, 4
        %v909 = vsel %vm884, %v908, %v891
        %v910 = vrot.slane %v891, 4
        %v911 = vsel %vm884, %v903, %v910
        %v913 = vunpack.c.l.s4 1934713408
        %v914 = vunpack.c.0.s8 %v913
        %v915 = vperm.slane %v909, %v914
        %v917 = vunpack.c.l.s4 1934713408
        %v918 = vunpack.c.0.s8 %v917
        %v919 = vperm.slane %v911, %v918
        %v920 = vrot.slane %v907, 4
        %v921 = vsel %vm884, %v920, %v895
        %v922 = vrot.slane %v895, 4
        %v923 = vsel %vm884, %v907, %v922
        %v925 = vunpack.c.l.s4 1934713408
        %v926 = vunpack.c.0.s8 %v925
        %v927 = vperm.slane %v921, %v926
        %v929 = vunpack.c.l.s4 1934713408
        %v930 = vunpack.c.0.s8 %v929
        %v931 = vperm.slane %v923, %v930
        %v932 = vrot.slane %v915, 4
        %v933 = vsel %vm884, 0.0, %v932
        %v934 = vrot.slane %v919, 4
        %v935 = vsel %vm884, 0.0, %v934
        %v936 = vrot.slane %v927, 4
        %v937 = vsel %vm884, 0.0, %v936
        %v938 = vrot.slane %v931, 4
        %v939 = vsel %vm884, 0.0, %v938
        %v940 = vsel %vm884, %v934, %v915
        %v942 = vunpack.c.l.s4 1983009808
        %v943 = vunpack.c.0.s8 %v942
        %v944 = vperm.slane %v940, %v943
        %v945 = vrot.slane %v935, 4
        %v946 = vsel %vm884, %v945, %v933
        %v948 = vunpack.c.l.s4 1983009808
        %v949 = vunpack.c.0.s8 %v948
        %v950 = vperm.slane %v946, %v949
        %v951 = vsel %vm884, %v938, %v927
        %v953 = vunpack.c.l.s4 1983009808
        %v954 = vunpack.c.0.s8 %v953
        %v955 = vperm.slane %v951, %v954
        %v956 = vrot.slane %v939, 4
        %v957 = vsel %vm884, %v956, %v937
        %v959 = vunpack.c.l.s4 1983009808
        %v960 = vunpack.c.0.s8 %v959
        %v961 = vperm.slane %v957, %v960
        %v962 = vrot.slane %v950, 4
        %v963 = vsel %vm884, %v962, %v944
        %v964 = vrot.slane %v944, 4
        %v965 = vsel %vm884, %v950, %v964
        %v967 = vunpack.c.l.s4 1934713408
        %v968 = vunpack.c.0.s8 %v967
        %v969 = vperm.slane %v963, %v968
        %v971 = vunpack.c.l.s4 1934713408
        %v972 = vunpack.c.0.s8 %v971
        %v973 = vperm.slane %v965, %v972
        %v974 = vrot.slane %v961, 4
        %v975 = vsel %vm884, %v974, %v955
        %v976 = vrot.slane %v955, 4
        %v977 = vsel %vm884, %v961, %v976
        %v979 = vunpack.c.l.s4 1934713408
        %v980 = vunpack.c.0.s8 %v979
        %v981 = vperm.slane %v975, %v980
        %v983 = vunpack.c.l.s4 1934713408
        %v984 = vunpack.c.0.s8 %v983
        %v985 = vperm.slane %v977, %v984
        %v986 = vrot.slane %v981, 4
        %v987 = vsel %vm884, %v986, %v969
        %v988 = vrot.slane %v969, 4
        %v989 = vsel %vm884, %v981, %v988
        %v990 = vrot.slane %v985, 4
        %v991 = vsel %vm884, %v990, %v973
        %v992 = vrot.slane %v973, 4
        %v993 = vsel %vm884, %v985, %v992
        %995 = vrot.lane.b32.xlu0 %v989, 8
        %v996 = vpop.permute.xlu0 %995
        %999 = vrot.lane.b32.xlu0 %v991, 16
        %v1000 = vpop.permute.xlu0 %999
        %1003 = vrot.lane.b32.xlu0 %v993, 24
        %v1004 = vpop.permute.xlu0 %1003
        %v1006 = vsel %vm681, %v987, %v996
        %vm1007 = vcmask 130048
        %v1008 = vsel %vm1007, %v1006, %v1000
        %vm1009 = vcmask 195584
        %v1010 = vsel %vm1009, %v1008, %v1004
        %v1011 = vpack.c.bf16 %v1010, %v1010
        %v1012 = vld [vmem:[#allocation7] sm:$0xf]
        %v1013 = vld [vmem:[#allocation7 + $0x4] sm:$0xf]
        %v1014 = vld [vmem:[#allocation7 + $0x8] sm:$0xf]
        %v1015 = vld [vmem:[#allocation7 + $0xc] sm:$0xf]
        %v1016 = vld [vmem:[%s4] sm:$0x1]
        %v1018 = vperm.slane %v1016, 0
        %v1024 = vunpack.c.l.b16 %v1012
        %v1025 = vunpack.c.l.b16 %v1013
        %v1026 = vunpack.c.l.b16 %v1014
        %v1027 = vunpack.c.l.b16 %v1015
        %v1028 = vpack.c.b16 %v1025, %v1024
        %v1029 = vpack.c.b16 %v1027, %v1026
        %v1033 = vsel %vm297, %v1011, 0
        %1035 = vmatpush.bf16.msra.mxu0 0
        %1036 = vmatpush.bf16.msra.mxu0 0
        %1037 = vmatpush.bf16.msra.mxu0 0
        %1038 = vmatpush.bf16.msra.mxu0 0
        %1039 = vmatpush.bf16.msra.mxu0 0
        %1040 = vmatpush.bf16.msra.mxu0 0
        %1041 = vmatpush.bf16.msra.mxu0 %v1029
        %1042 = vmatpush.bf16.msra.mxu0 %v1028
        %1043 = vmatmul.bf16.gmra.mxu0 %v1033
        %v1044 = vpop.f32.mrf.mxu0
        %v1045 = vadd.f32 %v1018, %v1044
        %v1046 = vpop.f32.mrf.mxu0
        %1047 = vdwg.mxu0
        %1048 = vst.msk [vmem:[%s274] sm:$0xff] %vm297, %v1045
        %s1049 = sand.u32 %s141, 1
        %s1050 = scalar_lea.sflag [#allocation4], %s1049
        %s1051 = sand.u32 %s141, 1
        %s1052 = smul.addr %s1051, 8
        %s1053 = scalar_lea.vmem [#allocation8], %s1052
        // Predicated region
        $region53: #{tpu_custom_call.1} parent=39 // pred_check
          %p1054 = pneg %p151
        $region54: #{tpu_custom_call.1} parent=39 // pred_check_branch
          %1056 = sbr.rel (%p1054) target = $region56
        $region55: #{tpu_custom_call.1} parent=39 // pred_region
          %1058 = vsyncadd %s1050, 0
          %s1059 = smul.addr %s23, 8
          %s1060 = scalar_lea.hbm %s5, %s1059
          %s1062 = sshll.u32 %s1053, 4
          %s1063 = int_to_ptr.vmem [resolvable:$true] %s1062
          %s1064 = sshll.u32 %s1060, 4
          %s1065 = int_to_ptr.hbm [resolvable:$true] %s1064
          %1067 = dma.vmem_to_hbm [thread:$0]  %s1063, 128, %s1065, %s1050
        $region56: #{tpu_custom_call.1} parent=39 // pred_fallthru
          _
      $region40: #{tpu_custom_call.1} parent=5 // pred_fallthru
        _
      %p1068 = scmp.le.s32.totalorder 2, %s18
      // Predicated region
      $region57: #{tpu_custom_call.1} parent=5 // pred_check
        %p1069 = pneg %p1068
      $region58: #{tpu_custom_call.1} parent=5 // pred_check_branch
        %1071 = sbr.rel (%p1069) target = $region60
      $region59: #{tpu_custom_call.1} parent=5 // pred_region
        %s1072 = ssub.s32 %s18, 2
        // Predicated region
        $region61: #{tpu_custom_call.1} parent=59 // pred_check
          %p1073 = pneg %p157
        $region62: #{tpu_custom_call.1} parent=59 // pred_check_branch
          %1075 = sbr.rel (%p1073) target = $region64
        $region63: #{tpu_custom_call.1} parent=59 // pred_region
          %s1076 = sand.u32 %s142, 1
          %s1077 = scalar_lea.sflag [#allocation4], %s1076
          %s1078 = sand.u32 %s142, 1
          %s1079 = smul.addr %s1078, 8
          %s1080 = scalar_lea.vmem [#allocation8], %s1079
          %1082 = dma.done %s1077, 128
        $region64: #{tpu_custom_call.1} parent=59 // pred_fallthru
          _
      $region60: #{tpu_custom_call.1} parent=5 // pred_fallthru
        _
    $region6: #{tpu_custom_call.1} parent=1 // loop_footer
      %s22 = sadd.s32 1, %s18
    $region7: #{tpu_custom_call.1} parent=1 // loop_footer_branch
      %17 = sbr.rel target = $region3
    $region8: #{tpu_custom_call.1} parent=1 // loop_exit
      _
    %1083 = vsyncpa [#allocation3], 1
    %s1084 = scalar_lea.sflag [#allocation3], 1
    %1085 = vsyncpa %s1084, 1
    %1086 = vsyncpa [#allocation6], 1
    %1087 = vsyncpa [#allocation4], 1
    %s1088 = scalar_lea.sflag [#allocation4], 1
    %1089 = vsyncpa %s1088, 1

// kernel: tpu_custom_call.1
$region0: #{tpu_custom_call.1}
  #allocation0 [shape = 'u32[]', space=smem, size = 0x4, offset = 0x4, fixed_abs, tag = 'smem constant byte address 0x4 - core index']
  #allocation1 [shape = 'u32[72,128]{1,0:T(1,128)}', space=vmem, size = 0x9000, scoped, tag = 'internal scratch']
  %s0 = inlined_call_operand.hbm [shape: bf16[2,8,32], index: 0, kind: input, shape index: {}]
  %s1 = inlined_call_operand.hbm [shape: bf16[32,96], index: 1, kind: input, shape index: {}]
  %s2 = inlined_call_operand.vmem [shape: f32[1,96], index: 2, kind: input, shape index: {}]
  %s3 = inlined_call_operand.hbm [shape: bf16[32,32], index: 3, kind: input, shape index: {}]
  %s4 = inlined_call_operand.vmem [shape: f32[1,32], index: 4, kind: input, shape index: {}]
  %s5 = inlined_call_operand.hbm [shape: f32[2,8,32], index: 5, kind: output, shape index: {}]
  %s6 = sld [smem:[#allocation0]]
  $region65: #{tpu_custom_call.1} parent=0
    _
  %s8 = ssub.s32 1, %s6
  %s9 = scalar_select 0, %s8, %s6
  $region1: #{tpu_custom_call.1} parent=0
    #allocation2 [shape = 'u8[4096]{0}', space=vmem, size = 0x1000, scoped, tag = 'input window, operand 0']
    #allocation3 [shape = 's32[2]{0}', space=sflag, size = 0x8, scoped, tag = 'scoped memory for tpu_custom_call.1']
    #allocation4 [shape = 's32[2]{0}', space=sflag, size = 0x8, scoped, tag = 'scoped memory for tpu_custom_call.1']
    #allocation5 [shape = 'u8[8192]{0}', space=vmem, size = 0x2000, scoped, tag = 'input window, operand 1, single buffered']
    #allocation6 [shape = 's32[1]{0}', space=sflag, size = 0x4, scoped, tag = 'scoped memory for tpu_custom_call.1']
    #allocation7 [shape = 'u8[8192]{0}', space=vmem, size = 0x2000, scoped, tag = 'input window, operand 3, single buffered']
    #allocation8 [shape = 'u8[8192]{0}', space=vmem, size = 0x2000, scoped, tag = 'output window, operand 0']
    %10 = vsyncpa [#allocation3], 0
    %s11 = scalar_lea.sflag [#allocation3], 1
    %12 = vsyncpa %s11, 0
    %13 = vsyncpa [#allocation6], 0
    %14 = vsyncpa [#allocation4], 0
    %s15 = scalar_lea.sflag [#allocation4], 1
    %16 = vsyncpa %s15, 0
    loop: start=0, step=1, limit=4
    $region2: #{tpu_custom_call.1} parent=1 // loop_pre_header
      _
    $region3: #{tpu_custom_call.1} parent=1 // loop_header
      %s18 = sphi 0, %s22
      %p19 = scmp.ge.s32.totalorder %s18, 4
      %s28 = sphi 0, %s30
      %s31 = sphi 0, %s28
      %s32 = sphi 0, %s31
      %s48 = sphi 0, %s32
      %s52 = sphi 0, %s52
      %s54 = sphi 0, %s52
      %s55 = sphi 0, %s54
      %s69 = sphi 0, %s55
      %s73 = sphi 0, %s73
      %s75 = sphi 0, %s73
      %s76 = sphi 0, %s75
      %s90 = sphi 0, %s76
      %s94 = sphi 0, %s94
      %s96 = sphi 0, %s94
      %s97 = sphi 0, %s96
      %s111 = sphi 0, %s97
      %s115 = sphi 0, %s115
      %s117 = sphi 0, %s115
      %s118 = sphi 0, %s117
      %s132 = sphi 0, %s118
      %s138 = sphi 0, %s140
      %s141 = sphi 0, %s138
      %s142 = sphi 0, %s141
      %s158 = sphi 0, %s142
    $region4: #{tpu_custom_call.1} parent=1 // loop_header_branch
      %21 = sbr.rel (%p19) target = $region8
    $region5: #{tpu_custom_call.1} parent=1 // loop_body
      %s23 = ssub.s32 %s18, 1
      %s24 = ssub.s32 %s18, 2
      %s25 = sadd.s32 %s18, 1
      %s26 = ssub.s32 %s18, %s25
      %p27 = scmp.eq.s32.totalorder %s26, 0
      %s29 = sadd.s32 %s28, 1
      %s30 = scalar_select %p27, %s28, %s29
      %p33 = pneg %p27
      %p34 = scmp.eq.s32.totalorder %s18, 1
      %p35 = por %p33, %p34
      %p36 = scmp.ne.s32.totalorder %s28, %s31
      %p37 = scmp.eq.s32.totalorder %s18, 0
      %p38 = por %p36, %p37
      %p39 = scmp.ne.s32.totalorder %s28, %s31
      %p40 = scmp.eq.s32.totalorder %s23, 1
      %p41 = por %p39, %p40
      %p42 = scmp.ne.s32.totalorder %s31, %s32
      %p43 = scmp.eq.s32.totalorder %s23, 0
      %p44 = por %p42, %p43
      %p45 = scmp.ne.s32.totalorder %s31, %s32
      %p46 = scmp.eq.s32.totalorder %s24, 1
      %p47 = por %p45, %p46
      %p49 = scmp.ne.s32.totalorder %s32, %s48
      %p50 = scmp.eq.s32.totalorder %s24, 0
      %p51 = por %p49, %p50
      %s53 = sadd.s32 %s52, 1
      %p56 = scmp.eq.s32.totalorder %s18, 1
      %p57 = scmp.ne.s32.totalorder %s52, %s54
      %p58 = scmp.eq.s32.totalorder %s18, 0
      %p59 = por %p57, %p58
      %p60 = scmp.ne.s32.totalorder %s52, %s54
      %p61 = scmp.eq.s32.totalorder %s23, 1
      %p62 = por %p60, %p61
      %p63 = scmp.ne.s32.totalorder %s54, %s55
      %p64 = scmp.eq.s32.totalorder %s23, 0
      %p65 = por %p63, %p64
      %p66 = scmp.ne.s32.totalorder %s54, %s55
      %p67 = scmp.eq.s32.totalorder %s24, 1
      %p68 = por %p66, %p67
      %p70 = scmp.ne.s32.totalorder %s55, %s69
      %p71 = scmp.eq.s32.totalorder %s24, 0
      %p72 = por %p70, %p71
      %s74 = sadd.s32 %s73, 1
      %p77 = scmp.eq.s32.totalorder %s18, 1
      %p78 = scmp.ne.s32.totalorder %s73, %s75
      %p79 = scmp.eq.s32.totalorder %s18, 0
      %p80 = por %p78, %p79
      %p81 = scmp.ne.s32.totalorder %s73, %s75
      %p82 = scmp.eq.s32.totalorder %s23, 1
      %p83 = por %p81, %p82
      %p84 = scmp.ne.s32.totalorder %s75, %s76
      %p85 = scmp.eq.s32.totalorder %s23, 0
      %p86 = por %p84, %p85
      %p87 = scmp.ne.s32.totalorder %s75, %s76
      %p88 = scmp.eq.s32.totalorder %s24, 1
      %p89 = por %p87, %p88
      %p91 = scmp.ne.s32.totalorder %s76, %s90
      %p92 = scmp.eq.s32.totalorder %s24, 0
      %p93 = por %p91, %p92
      %s95 = sadd.s32 %s94, 1
      %p98 = scmp.eq.s32.totalorder %s18, 1
      %p99 = scmp.ne.s32.totalorder %s94, %s96
      %p100 = scmp.eq.s32.totalorder %s18, 0
      %p101 = por %p99, %p100
      %p102 = scmp.ne.s32.totalorder %s94, %s96
      %p103 = scmp.eq.s32.totalorder %s23, 1
      %p104 = por %p102, %p103
      %p105 = scmp.ne.s32.totalorder %s96, %s97
      %p106 = scmp.eq.s32.totalorder %s23, 0
      %p107 = por %p105, %p106
      %p108 = scmp.ne.s32.totalorder %s96, %s97
      %p109 = scmp.eq.s32.totalorder %s24, 1
      %p110 = por %p108, %p109
      %p112 = scmp.ne.s32.totalorder %s97, %s111
      %p113 = scmp.eq.s32.totalorder %s24, 0
      %p114 = por %p112, %p113
      %s116 = sadd.s32 %s115, 1
      %p119 = scmp.eq.s32.totalorder %s18, 1
      %p120 = scmp.ne.s32.totalorder %s115, %s117
      %p121 = scmp.eq.s32.totalorder %s18, 0
      %p122 = por %p120, %p121
      %p123 = scmp.ne.s32.totalorder %s115, %s117
      %p124 = scmp.eq.s32.totalorder %s23, 1
      %p125 = por %p123, %p124
      %p126 = scmp.ne.s32.totalorder %s117, %s118
      %p127 = scmp.eq.s32.totalorder %s23, 0
      %p128 = por %p126, %p127
      %p129 = scmp.ne.s32.totalorder %s117, %s118
      %p130 = scmp.eq.s32.totalorder %s24, 1
      %p131 = por %p129, %p130
      %p133 = scmp.ne.s32.totalorder %s118, %s132
      %p134 = scmp.eq.s32.totalorder %s24, 0
      %p135 = por %p133, %p134
      %s136 = ssub.s32 %s18, %s25
      %p137 = scmp.eq.s32.totalorder %s136, 0
      %s139 = sadd.s32 %s138, 1
      %s140 = scalar_select %p137, %s138, %s139
      %p143 = pneg %p137
      %p144 = scmp.eq.s32.totalorder %s18, 1
      %p145 = por %p143, %p144
      %p146 = scmp.ne.s32.totalorder %s138, %s141
      %p147 = scmp.eq.s32.totalorder %s18, 0
      %p148 = por %p146, %p147
      %p149 = scmp.ne.s32.totalorder %s138, %s141
      %p150 = scmp.eq.s32.totalorder %s23, 1
      %p151 = por %p149, %p150
      %p152 = scmp.ne.s32.totalorder %s141, %s142
      %p153 = scmp.eq.s32.totalorder %s23, 0
      %p154 = por %p152, %p153
      %p155 = scmp.ne.s32.totalorder %s141, %s142
      %p156 = scmp.eq.s32.totalorder %s24, 1
      %p157 = por %p155, %p156
      %p159 = scmp.ne.s32.totalorder %s142, %s158
      %p160 = scmp.eq.s32.totalorder %s24, 0
      %p161 = por %p159, %p160
      %p162 = scmp.le.s32.totalorder 1, %s18
      %p163 = scmp.lt.s32.totalorder %s18, 3
      %p164 = pnand %p162, %p163
      %p165 = pneg %p164
      // Predicated region
      $region9: #{tpu_custom_call.1} parent=5 // pred_check
        _
      $region10: #{tpu_custom_call.1} parent=5 // pred_check_branch
        %167 = sbr.rel (%p164) target = $region12
      $region11: #{tpu_custom_call.1} parent=5 // pred_region
        %s168 = ssub.s32 %s18, 1
        // Predicated region
        $region13: #{tpu_custom_call.1} parent=11 // pred_check
          %p169 = pneg %p65
        $region14: #{tpu_custom_call.1} parent=11 // pred_check_branch
          %171 = sbr.rel (%p169) target = $region16
        $region15: #{tpu_custom_call.1} parent=11 // pred_region
          %173 = vsyncadd [#allocation6], 0
          %s174 = sshll.u32 %s1, 4
          %s175 = int_to_ptr.hbm [resolvable:$true] %s174
          %s176 = sshll.u32 [#allocation5], 4
          %s177 = int_to_ptr.vmem [resolvable:$true] %s176
          %182 = dma.hbm_to_vmem [thread:$0]  %s175, 256, %s177, [#allocation6], 64, 64, 4
        $region16: #{tpu_custom_call.1} parent=11 // pred_fallthru
          _
        // Predicated region
        $region17: #{tpu_custom_call.1} parent=11 // pred_check
          %p183 = pneg %p86
        $region18: #{tpu_custom_call.1} parent=11 // pred_check_branch
          %185 = sbr.rel (%p183) target = $region20
        $region19: #{tpu_custom_call.1} parent=11 // pred_region
          _
        $region20: #{tpu_custom_call.1} parent=11 // pred_fallthru
          _
        // Predicated region
        $region21: #{tpu_custom_call.1} parent=11 // pred_check
          %p186 = pneg %p107
        $region22: #{tpu_custom_call.1} parent=11 // pred_check_branch
          %188 = sbr.rel (%p186) target = $region24
        $region23: #{tpu_custom_call.1} parent=11 // pred_region
          %190 = vsyncadd [#allocation6], 0
          %s191 = sshll.u32 %s3, 4
          %s192 = int_to_ptr.hbm [resolvable:$true] %s191
          %s193 = sshll.u32 [#allocation7], 4
          %s194 = int_to_ptr.vmem [resolvable:$true] %s193
          %199 = dma.hbm_to_vmem [thread:$0]  %s192, 256, %s194, [#allocation6], 64, 64, 4
        $region24: #{tpu_custom_call.1} parent=11 // pred_fallthru
          _
        // Predicated region
        $region25: #{tpu_custom_call.1} parent=11 // pred_check
          %p200 = pneg %p128
        $region26: #{tpu_custom_call.1} parent=11 // pred_check_branch
          %202 = sbr.rel (%p200) target = $region28
        $region27: #{tpu_custom_call.1} parent=11 // pred_region
          _
        $region28: #{tpu_custom_call.1} parent=11 // pred_fallthru
          _
      $region12: #{tpu_custom_call.1} parent=5 // pred_fallthru
        _
      %p203 = scmp.lt.s32.totalorder %s18, 2
      // Predicated region
      $region29: #{tpu_custom_call.1} parent=5 // pred_check
        %p204 = pneg %p203
      $region30: #{tpu_custom_call.1} parent=5 // pred_check_branch
        %206 = sbr.rel (%p204) target = $region32
      $region31: #{tpu_custom_call.1} parent=5 // pred_region
        // Predicated region
        $region33: #{tpu_custom_call.1} parent=31 // pred_check
          %p207 = pneg %p38
        $region34: #{tpu_custom_call.1} parent=31 // pred_check_branch
          %209 = sbr.rel (%p207) target = $region36
        $region35: #{tpu_custom_call.1} parent=31 // pred_region
          %s210 = sand.u32 %s28, 1
          %s211 = scalar_lea.sflag [#allocation3], %s210
          %s212 = sand.u32 %s28, 1
          %s213 = smul.addr %s212, 4
          %s214 = scalar_lea.vmem [#allocation2], %s213
          %216 = vsyncadd %s211, 0
          %s217 = smul.addr %s18, 4
          %s218 = scalar_lea.hbm %s0, %s217
          %s220 = sshll.u32 %s218, 4
          %s221 = int_to_ptr.hbm [resolvable:$true] %s220
          %s222 = sshll.u32 %s214, 4
          %s223 = int_to_ptr.vmem [resolvable:$true] %s222
          %225 = dma.hbm_to_vmem [thread:$0]  %s221, 64, %s223, %s211
        $region36: #{tpu_custom_call.1} parent=31 // pred_fallthru
          _
      $region32: #{tpu_custom_call.1} parent=5 // pred_fallthru
        _
      %p226 = scmp.le.s32.totalorder 1, %s18
      %p227 = scmp.lt.s32.totalorder %s18, 3
      %p228 = pnand %p226, %p227
      %p229 = pneg %p228
      // Predicated region
      $region37: #{tpu_custom_call.1} parent=5 // pred_check
        _
      $region38: #{tpu_custom_call.1} parent=5 // pred_check_branch
        %231 = sbr.rel (%p228) target = $region40
      $region39: #{tpu_custom_call.1} parent=5 // pred_region
        %s232 = ssub.s32 %s18, 1
        %s233 = sand.u32 %s31, 1
        %s234 = scalar_lea.sflag [#allocation3], %s233
        %s235 = sand.u32 %s31, 1
        %s236 = smul.addr %s235, 4
        %s237 = scalar_lea.vmem [#allocation2], %s236
        // Predicated region
        $region41: #{tpu_custom_call.1} parent=39 // pred_check
          %p238 = pneg %p44
        $region42: #{tpu_custom_call.1} parent=39 // pred_check_branch
          %240 = sbr.rel (%p238) target = $region44
        $region43: #{tpu_custom_call.1} parent=39 // pred_region
          %242 = dma.done %s234, 64
        $region44: #{tpu_custom_call.1} parent=39 // pred_fallthru
          _
        // Predicated region
        $region45: #{tpu_custom_call.1} parent=39 // pred_check
          %p243 = pneg %p65
        $region46: #{tpu_custom_call.1} parent=39 // pred_check_branch
          %245 = sbr.rel (%p243) target = $region48
        $region47: #{tpu_custom_call.1} parent=39 // pred_region
          %247 = dma.done [#allocation6], 256
        $region48: #{tpu_custom_call.1} parent=39 // pred_fallthru
          _
        // Predicated region
        $region49: #{tpu_custom_call.1} parent=39 // pred_check
          %p248 = pneg %p107
        $region50: #{tpu_custom_call.1} parent=39 // pred_check_branch
          %250 = sbr.rel (%p248) target = $region52
        $region51: #{tpu_custom_call.1} parent=39 // pred_region
          %252 = dma.done [#allocation6], 256
        $region52: #{tpu_custom_call.1} parent=39 // pred_fallthru
          _
        %s253 = sand.u32 %s31, 1
        %s254 = scalar_lea.sflag [#allocation3], %s253
        %s255 = sand.u32 %s31, 1
        %s256 = smul.addr %s255, 4
        %s257 = scalar_lea.vmem [#allocation2], %s256
        %p258 = pneg %p44
        %p259 = pneg %p41
        %p260 = pneg %p65
        %p261 = pneg %p62
        %p262 = pneg %p86
        %p263 = pneg %p83
        %p264 = pneg %p107
        %p265 = pneg %p104
        %p266 = pneg %p128
        %p267 = pneg %p125
        %p268 = pneg %p154
        %p269 = pneg %p151
        %s270 = sand.u32 %s141, 1
        %s271 = scalar_lea.sflag [#allocation4], %s270
        %s272 = sand.u32 %s141, 1
        %s273 = smul.addr %s272, 8
        %s274 = scalar_lea.vmem [#allocation8], %s273
        %v276 = vld [vmem:[%s237] sm:$0xf]
        %v277 = vld [vmem:[#allocation5] sm:$0xf]
        %v278 = vld [vmem:[#allocation5 + $0x4] sm:$0xf]
        %v279 = vld [vmem:[#allocation5 + $0x8] sm:$0xf]
        %v280 = vld [vmem:[#allocation5 + $0xc] sm:$0xf]
        %v281 = vld [vmem:[%s2] sm:$0x1]
        %v283 = vperm.slane %v281, 0
        %v289 = vunpack.c.l.b16 %v277
        %v290 = vunpack.c.l.b16 %v278
        %v291 = vunpack.c.l.b16 %v279
        %v292 = vunpack.c.l.b16 %v280
        %v293 = vpack.c.b16 %v290, %v289
        %v294 = vpack.c.b16 %v292, %v291
        %vm297 = vcmask 261120
        %v299 = vsel %vm297, %v276, 0
        %301 = vmatpush.bf16.msra.mxu0 0
        %302 = vmatpush.bf16.msra.mxu0 0
        %303 = vmatpush.bf16.msra.mxu0 0
        %304 = vmatpush.bf16.msra.mxu0 0
        %305 = vmatpush.bf16.msra.mxu0 0
        %306 = vmatpush.bf16.msra.mxu0 0
        %307 = vmatpush.bf16.msra.mxu0 %v294
        %308 = vmatpush.bf16.msra.mxu0 %v293
        %309 = vmatmul.bf16.gmra.mxu0 %v299
        %v310 = vpop.f32.mrf.mxu0
        %v311 = vadd.f32 %v283, %v310
        %v312 = vpop.f32.mrf.mxu0
        %313 = vdwg.mxu0
        %v314 = vpack.c.bf16 %v311, %v311
        %316 = vrot.lane.b32.xlu0 %v314, 120
        %v317 = vpop.permute.xlu0 %316
        %318 = vrot.lane.b32.xlu0 %v314, 112
        %v319 = vpop.permute.xlu0 %318
        %320 = vrot.lane.b32.xlu0 %v314, 104
        %v321 = vpop.permute.xlu0 %320
        %v324 = vpack.i.b16 %v317, %v314
        %v325 = vshrl.u32 %v314, 16
        %v326 = vshrl.u32 %v317, 16
        %v327 = vpack.i.b16 %v326, %v325
        %v330 = vpack.i.b16 %v321, %v319
        %v331 = vshrl.u32 %v319, 16
        %v332 = vshrl.u32 %v321, 16
        %v333 = vpack.i.b16 %v332, %v331
        %v336 = vunpack.c.l.s4 1983009808
        %v337 = vunpack.c.0.s8 %v336
        %v338 = vperm.slane %v324, %v337
        %v341 = vunpack.c.l.s4 1983009808
        %v342 = vunpack.c.0.s8 %v341
        %v343 = vperm.slane %v330, %v342
        %v344 = vrot.slane %v343, 4
        %vm345 = vcmask 1047556
        %v346 = vsel %vm345, %v344, %v338
        %v347 = vrot.slane %v338, 4
        %v348 = vsel %vm345, %v343, %v347
        %v350 = vunpack.c.l.s4 1934713408
        %v351 = vunpack.c.0.s8 %v350
        %v352 = vperm.slane %v346, %v351
        %v354 = vunpack.c.l.s4 1934713408
        %v355 = vunpack.c.0.s8 %v354
        %v356 = vperm.slane %v348, %v355
        %v357 = vrot.slane %v352, 4
        %v358 = vsel %vm345, 0, %v357
        %v359 = vrot.slane %v356, 4
        %v360 = vsel %vm345, 0, %v359
        %v363 = vunpack.c.l.s4 1983009808
        %v364 = vunpack.c.0.s8 %v363
        %v365 = vperm.slane %v327, %v364
        %v368 = vunpack.c.l.s4 1983009808
        %v369 = vunpack.c.0.s8 %v368
        %v370 = vperm.slane %v333, %v369
        %v371 = vrot.slane %v370, 4
        %v372 = vsel %vm345, %v371, %v365
        %v373 = vrot.slane %v365, 4
        %v374 = vsel %vm345, %v370, %v373
        %v376 = vunpack.c.l.s4 1934713408
        %v377 = vunpack.c.0.s8 %v376
        %v378 = vperm.slane %v372, %v377
        %v380 = vunpack.c.l.s4 1934713408
        %v381 = vunpack.c.0.s8 %v380
        %v382 = vperm.slane %v374, %v381
        %v383 = vrot.slane %v378, 4
        %v384 = vsel %vm345, 0, %v383
        %v385 = vrot.slane %v382, 4
        %v386 = vsel %vm345, 0, %v385
        %v387 = vsel %vm345, %v359, %v352
        %v389 = vunpack.c.l.s4 1983009808
        %v390 = vunpack.c.0.s8 %v389
        %v391 = vperm.slane %v387, %v390
        %v392 = vrot.slane %v360, 4
        %v393 = vsel %vm345, %v392, %v358
        %v395 = vunpack.c.l.s4 1983009808
        %v396 = vunpack.c.0.s8 %v395
        %v397 = vperm.slane %v393, %v396
        %v398 = vrot.slane %v397, 4
        %v399 = vsel %vm345, %v398, %v391
        %v401 = vunpack.c.l.s4 1934713408
        %v402 = vunpack.c.0.s8 %v401
        %v403 = vperm.slane %v399, %v402
        %v404 = vrot.slane %v403, 4
        %v405 = vsel %vm345, 0, %v404
        %v406 = vsel %vm345, %v385, %v378
        %v408 = vunpack.c.l.s4 1983009808
        %v409 = vunpack.c.0.s8 %v408
        %v410 = vperm.slane %v406, %v409
        %v411 = vrot.slane %v386, 4
        %v412 = vsel %vm345, %v411, %v384
        %v414 = vunpack.c.l.s4 1983009808
        %v415 = vunpack.c.0.s8 %v414
        %v416 = vperm.slane %v412, %v415
        %v417 = vrot.slane %v416, 4
        %v418 = vsel %vm345, %v417, %v410
        %v420 = vunpack.c.l.s4 1934713408
        %v421 = vunpack.c.0.s8 %v420
        %v422 = vperm.slane %v418, %v421
        %v423 = vrot.slane %v422, 4
        %v424 = vsel %vm345, 0, %v423
        %v427 = vpack.i.b16 %v422, %v403
        %v428 = vshrl.u32 %v403, 16
        %v429 = vshrl.u32 %v422, 16
        %v430 = vpack.i.b16 %v429, %v428
        %v433 = vpack.i.b16 %v424, %v405
        %v434 = vshrl.u32 %v405, 16
        %v435 = vshrl.u32 %v424, 16
        %v436 = vpack.i.b16 %v435, %v434
        %437 = vrot.lane.b32.xlu0 %v314, 96
        %v438 = vpop.permute.xlu0 %437
        %439 = vrot.lane.b32.xlu0 %v317, 96
        %v440 = vpop.permute.xlu0 %439
        %441 = vrot.lane.b32.xlu0 %v319, 96
        %v442 = vpop.permute.xlu0 %441
        %443 = vrot.lane.b32.xlu0 %v321, 96
        %v444 = vpop.permute.xlu0 %443
        %v447 = vpack.i.b16 %v440, %v438
        %v448 = vshrl.u32 %v438, 16
        %v449 = vshrl.u32 %v440, 16
        %v450 = vpack.i.b16 %v449, %v448
        %v453 = vpack.i.b16 %v444, %v442
        %v454 = vshrl.u32 %v442, 16
        %v455 = vshrl.u32 %v444, 16
        %v456 = vpack.i.b16 %v455, %v454
        %v459 = vunpack.c.l.s4 1983009808
        %v460 = vunpack.c.0.s8 %v459
        %v461 = vperm.slane %v447, %v460
        %v464 = vunpack.c.l.s4 1983009808
        %v465 = vunpack.c.0.s8 %v464
        %v466 = vperm.slane %v453, %v465
        %v467 = vrot.slane %v466, 4
        %v468 = vsel %vm345, %v467, %v461
        %v469 = vrot.slane %v461, 4
        %v470 = vsel %vm345, %v466, %v469
        %v472 = vunpack.c.l.s4 1934713408
        %v473 = vunpack.c.0.s8 %v472
        %v474 = vperm.slane %v468, %v473
        %v476 = vunpack.c.l.s4 1934713408
        %v477 = vunpack.c.0.s8 %v476
        %v478 = vperm.slane %v470, %v477
        %v479 = vrot.slane %v474, 4
        %v480 = vsel %vm345, 0, %v479
        %v481 = vrot.slane %v478, 4
        %v482 = vsel %vm345, 0, %v481
        %v485 = vunpack.c.l.s4 1983009808
        %v486 = vunpack.c.0.s8 %v485
        %v487 = vperm.slane %v450, %v486
        %v490 = vunpack.c.l.s4 1983009808
        %v491 = vunpack.c.0.s8 %v490
        %v492 = vperm.slane %v456, %v491
        %v493 = vrot.slane %v492, 4
        %v494 = vsel %vm345, %v493, %v487
        %v495 = vrot.slane %v487, 4
        %v496 = vsel %vm345, %v492, %v495
        %v498 = vunpack.c.l.s4 1934713408
        %v499 = vunpack.c.0.s8 %v498
        %v500 = vperm.slane %v494, %v499
        %v502 = vunpack.c.l.s4 1934713408
        %v503 = vunpack.c.0.s8 %v502
        %v504 = vperm.slane %v496, %v503
        %v505 = vrot.slane %v500, 4
        %v506 = vsel %vm345, 0, %v505
        %v507 = vrot.slane %v504, 4
        %v508 = vsel %vm345, 0, %v507
        %v509 = vsel %vm345, %v481, %v474
        %v511 = vunpack.c.l.s4 1983009808
        %v512 = vunpack.c.0.s8 %v511
        %v513 = vperm.slane %v509, %v512
        %v514 = vrot.slane %v482, 4
        %v515 = vsel %vm345, %v514, %v480
        %v517 = vunpack.c.l.s4 1983009808
        %v518 = vunpack.c.0.s8 %v517
        %v519 = vperm.slane %v515, %v518
        %v520 = vrot.slane %v519, 4
        %v521 = vsel %vm345, %v520, %v513
        %v523 = vunpack.c.l.s4 1934713408
        %v524 = vunpack.c.0.s8 %v523
        %v525 = vperm.slane %v521, %v524
        %v526 = vrot.slane %v525, 4
        %v527 = vsel %vm345, 0, %v526
        %v528 = vsel %vm345, %v507, %v500
        %v530 = vunpack.c.l.s4 1983009808
        %v531 = vunpack.c.0.s8 %v530
        %v532 = vperm.slane %v528, %v531
        %v533 = vrot.slane %v508, 4
        %v534 = vsel %vm345, %v533, %v506
        %v536 = vunpack.c.l.s4 1983009808
        %v537 = vunpack.c.0.s8 %v536
        %v538 = vperm.slane %v534, %v537
        %v539 = vrot.slane %v538, 4
        %v540 = vsel %vm345, %v539, %v532
        %v542 = vunpack.c.l.s4 1934713408
        %v543 = vunpack.c.0.s8 %v542
        %v544 = vperm.slane %v540, %v543
        %v545 = vrot.slane %v544, 4
        %v546 = vsel %vm345, 0, %v545
        %v549 = vpack.i.b16 %v544, %v525
        %v550 = vshrl.u32 %v525, 16
        %v551 = vshrl.u32 %v544, 16
        %v552 = vpack.i.b16 %v551, %v550
        %v555 = vpack.i.b16 %v546, %v527
        %v556 = vshrl.u32 %v527, 16
        %v557 = vshrl.u32 %v546, 16
        %v558 = vpack.i.b16 %v557, %v556
        %559 = vrot.lane.b32.xlu0 %v314, 64
        %v560 = vpop.permute.xlu0 %559
        %561 = vrot.lane.b32.xlu0 %v317, 64
        %v562 = vpop.permute.xlu0 %561
        %563 = vrot.lane.b32.xlu0 %v319, 64
        %v564 = vpop.permute.xlu0 %563
        %565 = vrot.lane.b32.xlu0 %v321, 64
        %v566 = vpop.permute.xlu0 %565
        %v569 = vpack.i.b16 %v562, %v560
        %v570 = vshrl.u32 %v560, 16
        %v571 = vshrl.u32 %v562, 16
        %v572 = vpack.i.b16 %v571, %v570
        %v575 = vpack.i.b16 %v566, %v564
        %v576 = vshrl.u32 %v564, 16
        %v577 = vshrl.u32 %v566, 16
        %v578 = vpack.i.b16 %v577, %v576
        %v581 = vunpack.c.l.s4 1983009808
        %v582 = vunpack.c.0.s8 %v581
        %v583 = vperm.slane %v569, %v582
        %v586 = vunpack.c.l.s4 1983009808
        %v587 = vunpack.c.0.s8 %v586
        %v588 = vperm.slane %v575, %v587
        %v589 = vrot.slane %v588, 4
        %v590 = vsel %vm345, %v589, %v583
        %v591 = vrot.slane %v583, 4
        %v592 = vsel %vm345, %v588, %v591
        %v594 = vunpack.c.l.s4 1934713408
        %v595 = vunpack.c.0.s8 %v594
        %v596 = vperm.slane %v590, %v595
        %v598 = vunpack.c.l.s4 1934713408
        %v599 = vunpack.c.0.s8 %v598
        %v600 = vperm.slane %v592, %v599
        %v601 = vrot.slane %v596, 4
        %v602 = vsel %vm345, 0, %v601
        %v603 = vrot.slane %v600, 4
        %v604 = vsel %vm345, 0, %v603
        %v607 = vunpack.c.l.s4 1983009808
        %v608 = vunpack.c.0.s8 %v607
        %v609 = vperm.slane %v572, %v608
        %v612 = vunpack.c.l.s4 1983009808
        %v613 = vunpack.c.0.s8 %v612
        %v614 = vperm.slane %v578, %v613
        %v615 = vrot.slane %v614, 4
        %v616 = vsel %vm345, %v615, %v609
        %v617 = vrot.slane %v609, 4
        %v618 = vsel %vm345, %v614, %v617
        %v620 = vunpack.c.l.s4 1934713408
        %v621 = vunpack.c.0.s8 %v620
        %v622 = vperm.slane %v616, %v621
        %v624 = vunpack.c.l.s4 1934713408
        %v625 = vunpack.c.0.s8 %v624
        %v626 = vperm.slane %v618, %v625
        %v627 = vrot.slane %v622, 4
        %v628 = vsel %vm345, 0, %v627
        %v629 = vrot.slane %v626, 4
        %v630 = vsel %vm345, 0, %v629
        %v631 = vsel %vm345, %v603, %v596
        %v633 = vunpack.c.l.s4 1983009808
        %v634 = vunpack.c.0.s8 %v633
        %v635 = vperm.slane %v631, %v634
        %v636 = vrot.slane %v604, 4
        %v637 = vsel %vm345, %v636, %v602
        %v639 = vunpack.c.l.s4 1983009808
        %v640 = vunpack.c.0.s8 %v639
        %v641 = vperm.slane %v637, %v640
        %v642 = vrot.slane %v641, 4
        %v643 = vsel %vm345, %v642, %v635
        %v645 = vunpack.c.l.s4 1934713408
        %v646 = vunpack.c.0.s8 %v645
        %v647 = vperm.slane %v643, %v646
        %v648 = vrot.slane %v647, 4
        %v649 = vsel %vm345, 0, %v648
        %v650 = vsel %vm345, %v629, %v622
        %v652 = vunpack.c.l.s4 1983009808
        %v653 = vunpack.c.0.s8 %v652
        %v654 = vperm.slane %v650, %v653
        %v655 = vrot.slane %v630, 4
        %v656 = vsel %vm345, %v655, %v628
        %v658 = vunpack.c.l.s4 1983009808
        %v659 = vunpack.c.0.s8 %v658
        %v660 = vperm.slane %v656, %v659
        %v661 = vrot.slane %v660, 4
        %v662 = vsel %vm345, %v661, %v654
        %v664 = vunpack.c.l.s4 1934713408
        %v665 = vunpack.c.0.s8 %v664
        %v666 = vperm.slane %v662, %v665
        %v667 = vrot.slane %v666, 4
        %v668 = vsel %vm345, 0, %v667
        %v671 = vpack.i.b16 %v666, %v647
        %v672 = vshrl.u32 %v647, 16
        %v673 = vshrl.u32 %v666, 16
        %v674 = vpack.i.b16 %v673, %v672
        %v677 = vpack.i.b16 %v668, %v649
        %v678 = vshrl.u32 %v649, 16
        %v679 = vshrl.u32 %v668, 16
        %v680 = vpack.i.b16 %v679, %v678
        %vm681 = vcmask 64512
        %v683 = vsel %vm681, %v427, 0
        %v686 = vsel %vm681, %v549, 0
        %688 = vmatpush.bf16.xpose.msra.mxu0 0
        %689 = vmatpush.bf16.xpose.msra.mxu0 0
        %690 = vmatpush.bf16.xpose.msra.mxu0 0
        %691 = vmatpush.bf16.xpose.msra.mxu0 0
        %692 = vmatpush.bf16.xpose.msra.mxu0 0
        %693 = vmatpush.bf16.xpose.msra.mxu0 0
        %694 = vmatpush.bf16.xpose.msra.mxu0 0
        %695 = vmatpush.bf16.xpose.msra.mxu0 %v686
        %696 = vmatmul.bf16.gmra.mxu0 %v683
        %v697 = vpop.f32.mrf.mxu0
        %v698 = vadd.f32 0.0, %v697
        %v699 = vpop.f32.mrf.mxu0
        %700 = vdwg.mxu0
        %v702 = vsel %vm681, %v430, 0
        %v705 = vsel %vm681, %v552, 0
        %707 = vmatpush.bf16.xpose.msra.mxu0 0
        %708 = vmatpush.bf16.xpose.msra.mxu0 0
        %709 = vmatpush.bf16.xpose.msra.mxu0 0
        %710 = vmatpush.bf16.xpose.msra.mxu0 0
        %711 = vmatpush.bf16.xpose.msra.mxu0 0
        %712 = vmatpush.bf16.xpose.msra.mxu0 0
        %713 = vmatpush.bf16.xpose.msra.mxu0 0
        %714 = vmatpush.bf16.xpose.msra.mxu0 %v705
        %715 = vmatmul.bf16.gmra.mxu0 %v702
        %v716 = vpop.f32.mrf.mxu0
        %v717 = vadd.f32 0.0, %v716
        %v718 = vpop.f32.mrf.mxu0
        %719 = vdwg.mxu0
        %v721 = vsel %vm681, %v433, 0
        %v724 = vsel %vm681, %v555, 0
        %726 = vmatpush.bf16.xpose.msra.mxu0 0
        %727 = vmatpush.bf16.xpose.msra.mxu0 0
        %728 = vmatpush.bf16.xpose.msra.mxu0 0
        %729 = vmatpush.bf16.xpose.msra.mxu0 0
        %730 = vmatpush.bf16.xpose.msra.mxu0 0
        %731 = vmatpush.bf16.xpose.msra.mxu0 0
        %732 = vmatpush.bf16.xpose.msra.mxu0 0
        %733 = vmatpush.bf16.xpose.msra.mxu0 %v724
        %734 = vmatmul.bf16.gmra.mxu0 %v721
        %v735 = vpop.f32.mrf.mxu0
        %v736 = vadd.f32 0.0, %v735
        %v737 = vpop.f32.mrf.mxu0
        %738 = vdwg.mxu0
        %v740 = vsel %vm681, %v436, 0
        %v743 = vsel %vm681, %v558, 0
        %745 = vmatpush.bf16.xpose.msra.mxu0 0
        %746 = vmatpush.bf16.xpose.msra.mxu0 0
        %747 = vmatpush.bf16.xpose.msra.mxu0 0
        %748 = vmatpush.bf16.xpose.msra.mxu0 0
        %749 = vmatpush.bf16.xpose.msra.mxu0 0
        %750 = vmatpush.bf16.xpose.msra.mxu0 0
        %751 = vmatpush.bf16.xpose.msra.mxu0 0
        %752 = vmatpush.bf16.xpose.msra.mxu0 %v743
        %753 = vmatmul.bf16.gmra.mxu0 %v740
        %v754 = vpop.f32.mrf.mxu0
        %v755 = vadd.f32 0.0, %v754
        %v756 = vpop.f32.mrf.mxu0
        %757 = vdwg.mxu0
        %v758 = vsel %vm681, %v698, -inf
        %759 = vmax.xlane.f32.xlu0 %v758
        %v760 = vpop.xlane.xlu0 %759
        %v761 = vsel %vm681, %v717, -inf
        %762 = vmax.xlane.f32.xlu0 %v761
        %v763 = vpop.xlane.xlu0 %762
        %v764 = vsel %vm681, %v736, -inf
        %765 = vmax.xlane.f32.xlu0 %v764
        %v766 = vpop.xlane.xlu0 %765
        %v767 = vsel %vm681, %v755, -inf
        %768 = vmax.xlane.f32.xlu0 %v767
        %v769 = vpop.xlane.xlu0 %768
        %v770 = vsub.f32 %v698, %v760
        %v771 = vsub.f32 %v717, %v763
        %v772 = vsub.f32 %v736, %v766
        %v773 = vsub.f32 %v755, %v769
        %v774 = vmul.f32 %v770, 1.442695
        %v775 = vpow.pop %v774
        %v776 = vmul.f32 %v771, 1.442695
        %v777 = vpow.pop %v776
        %v778 = vmul.f32 %v772, 1.442695
        %v779 = vpow.pop %v778
        %v780 = vmul.f32 %v773, 1.442695
        %v781 = vpow.pop %v780
        %v782 = vsel %vm681, %v775, 0.0
        %783 = vadd.xlane.f32.xlu0 %v782
        %v784 = vpop.xlane.xlu0 %783
        %v785 = vsel %vm681, %v777, 0.0
        %786 = vadd.xlane.f32.xlu0 %v785
        %v787 = vpop.xlane.xlu0 %786
        %v788 = vsel %vm681, %v779, 0.0
        %789 = vadd.xlane.f32.xlu0 %v788
        %v790 = vpop.xlane.xlu0 %789
        %v791 = vsel %vm681, %v781, 0.0
        %792 = vadd.xlane.f32.xlu0 %v791
        %v793 = vpop.xlane.xlu0 %792
        %v794 = vrcp.pop %v784
        %v795 = vrcp.pop %v787
        %v796 = vrcp.pop %v790
        %v797 = vrcp.pop %v793
        %v798 = vmul.f32 %v775, %v794
        %v799 = vmul.f32 %v777, %v795
        %v800 = vmul.f32 %v779, %v796
        %v801 = vmul.f32 %v781, %v797
        %v802 = vpack.c.bf16 %v798, %v798
        %v803 = vpack.c.bf16 %v799, %v799
        %v804 = vpack.c.bf16 %v800, %v800
        %v805 = vpack.c.bf16 %v801, %v801
        %v807 = vsel %vm681, %v802, 0
        %vm809 = vcmask 1043456
        %v811 = vsel %vm809, %v671, 0
        %813 = vmatpush.bf16.msra.mxu0 0
        %814 = vmatpush.bf16.msra.mxu0 0
        %815 = vmatpush.bf16.msra.mxu0 0
        %816 = vmatpush.bf16.msra.mxu0 0
        %817 = vmatpush.bf16.msra.mxu0 0
        %818 = vmatpush.bf16.msra.mxu0 0
        %819 = vmatpush.bf16.msra.mxu0 0
        %820 = vmatpush.bf16.msra.mxu0 %v811
        %821 = vmatmul.bf16.gmra.mxu0 %v807
        %v822 = vpop.f32.mrf.mxu0
        %v823 = vadd.f32 0.0, %v822
        %v824 = vpop.f32.mrf.mxu0
        %825 = vdwg.mxu0
        %v827 = vsel %vm681, %v803, 0
        %v830 = vsel %vm809, %v674, 0
        %832 = vmatpush.bf16.msra.mxu0 0
        %833 = vmatpush.bf16.msra.mxu0 0
        %834 = vmatpush.bf16.msra.mxu0 0
        %835 = vmatpush.bf16.msra.mxu0 0
        %836 = vmatpush.bf16.msra.mxu0 0
        %837 = vmatpush.bf16.msra.mxu0 0
        %838 = vmatpush.bf16.msra.mxu0 0
        %839 = vmatpush.bf16.msra.mxu0 %v830
        %840 = vmatmul.bf16.gmra.mxu0 %v827
        %v841 = vpop.f32.mrf.mxu0
        %v842 = vadd.f32 0.0, %v841
        %v843 = vpop.f32.mrf.mxu0
        %844 = vdwg.mxu0
        %v846 = vsel %vm681, %v804, 0
        %v849 = vsel %vm809, %v677, 0
        %851 = vmatpush.bf16.msra.mxu0 0
        %852 = vmatpush.bf16.msra.mxu0 0
        %853 = vmatpush.bf16.msra.mxu0 0
        %854 = vmatpush.bf16.msra.mxu0 0
        %855 = vmatpush.bf16.msra.mxu0 0
        %856 = vmatpush.bf16.msra.mxu0 0
        %857 = vmatpush.bf16.msra.mxu0 0
        %858 = vmatpush.bf16.msra.mxu0 %v849
        %859 = vmatmul.bf16.gmra.mxu0 %v846
        %v860 = vpop.f32.mrf.mxu0
        %v861 = vadd.f32 0.0, %v860
        %v862 = vpop.f32.mrf.mxu0
        %863 = vdwg.mxu0
        %v865 = vsel %vm681, %v805, 0
        %v868 = vsel %vm809, %v680, 0
        %870 = vmatpush.bf16.msra.mxu0 0
        %871 = vmatpush.bf16.msra.mxu0 0
        %872 = vmatpush.bf16.msra.mxu0 0
        %873 = vmatpush.bf16.msra.mxu0 0
        %874 = vmatpush.bf16.msra.mxu0 0
        %875 = vmatpush.bf16.msra.mxu0 0
        %876 = vmatpush.bf16.msra.mxu0 0
        %877 = vmatpush.bf16.msra.mxu0 %v868
        %878 = vmatmul.bf16.gmra.mxu0 %v865
        %v879 = vpop.f32.mrf.mxu0
        %v880 = vadd.f32 0.0, %v879
        %v881 = vpop.f32.mrf.mxu0
        %882 = vdwg.mxu0
        %v883 = vrot.slane %v861, 4
        %vm884 = vcmask 1047556
        %v885 = vsel %vm884, %v883, %v823
        %v886 = vrot.slane %v823, 4
        %v887 = vsel %vm884, %v861, %v886
        %v889 = vunpack.c.l.s4 1983009808
        %v890 = vunpack.c.0.s8 %v889
        %v891 = vperm.slane %v885, %v890
        %v893 = vunpack.c.l.s4 1983009808
        %v894 = vunpack.c.0.s8 %v893
        %v895 = vperm.slane %v887, %v894
        %v896 = vrot.slane %v880, 4
        %v897 = vsel %vm884, %v896, %v842
        %v898 = vrot.slane %v842, 4
        %v899 = vsel %vm884, %v880, %v898
        %v901 = vunpack.c.l.s4 1983009808
        %v902 = vunpack.c.0.s8 %v901
        %v903 = vperm.slane %v897, %v902
        %v905 = vunpack.c.l.s4 1983009808
        %v906 = vunpack.c.0.s8 %v905
        %v907 = vperm.slane %v899, %v906
        %v908 = vrot.slane %v903, 4
        %v909 = vsel %vm884, %v908, %v891
        %v910 = vrot.slane %v891, 4
        %v911 = vsel %vm884, %v903, %v910
        %v913 = vunpack.c.l.s4 1934713408
        %v914 = vunpack.c.0.s8 %v913
        %v915 = vperm.slane %v909, %v914
        %v917 = vunpack.c.l.s4 1934713408
        %v918 = vunpack.c.0.s8 %v917
        %v919 = vperm.slane %v911, %v918
        %v920 = vrot.slane %v907, 4
        %v921 = vsel %vm884, %v920, %v895
        %v922 = vrot.slane %v895, 4
        %v923 = vsel %vm884, %v907, %v922
        %v925 = vunpack.c.l.s4 1934713408
        %v926 = vunpack.c.0.s8 %v925
        %v927 = vperm.slane %v921, %v926
        %v929 = vunpack.c.l.s4 1934713408
        %v930 = vunpack.c.0.s8 %v929
        %v931 = vperm.slane %v923, %v930
        %v932 = vrot.slane %v915, 4
        %v933 = vsel %vm884, 0.0, %v932
        %v934 = vrot.slane %v919, 4
        %v935 = vsel %vm884, 0.0, %v934
        %v936 = vrot.slane %v927, 4
        %v937 = vsel %vm884, 0.0, %v936
        %v938 = vrot.slane %v931, 4
        %v939 = vsel %vm884, 0.0, %v938
        %v940 = vsel %vm884, %v934, %v915
        %v942 = vunpack.c.l.s4 1983009808
        %v943 = vunpack.c.0.s8 %v942
        %v944 = vperm.slane %v940, %v943
        %v945 = vrot.slane %v935, 4
        %v946 = vsel %vm884, %v945, %v933
        %v948 = vunpack.c.l.s4 1983009808
        %v949 = vunpack.c.0.s8 %v948
        %v950 = vperm.slane %v946, %v949
        %v951 = vsel %vm884, %v938, %v927
        %v953 = vunpack.c.l.s4 1983009808
        %v954 = vunpack.c.0.s8 %v953
        %v955 = vperm.slane %v951, %v954
        %v956 = vrot.slane %v939, 4
        %v957 = vsel %vm884, %v956, %v937
        %v959 = vunpack.c.l.s4 1983009808
        %v960 = vunpack.c.0.s8 %v959
        %v961 = vperm.slane %v957, %v960
        %v962 = vrot.slane %v950, 4
        %v963 = vsel %vm884, %v962, %v944
        %v964 = vrot.slane %v944, 4
        %v965 = vsel %vm884, %v950, %v964
        %v967 = vunpack.c.l.s4 1934713408
        %v968 = vunpack.c.0.s8 %v967
        %v969 = vperm.slane %v963, %v968
        %v971 = vunpack.c.l.s4 1934713408
        %v972 = vunpack.c.0.s8 %v971
        %v973 = vperm.slane %v965, %v972
        %v974 = vrot.slane %v961, 4
        %v975 = vsel %vm884, %v974, %v955
        %v976 = vrot.slane %v955, 4
        %v977 = vsel %vm884, %v961, %v976
        %v979 = vunpack.c.l.s4 1934713408
        %v980 = vunpack.c.0.s8 %v979
        %v981 = vperm.slane %v975, %v980
        %v983 = vunpack.c.l.s4 1934713408
        %v984 = vunpack.c.0.s8 %v983
        %v985 = vperm.slane %v977, %v984
        %v986 = vrot.slane %v981, 4
        %v987 = vsel %vm884, %v986, %v969
        %v988 = vrot.slane %v969, 4
        %v989 = vsel %vm884, %v981, %v988
        %v990 = vrot.slane %v985, 4
        %v991 = vsel %vm884, %v990, %v973
        %v992 = vrot.slane %v973, 4
        %v993 = vsel %vm884, %v985, %v992
        %995 = vrot.lane.b32.xlu0 %v989, 8
        %v996 = vpop.permute.xlu0 %995
        %999 = vrot.lane.b32.xlu0 %v991, 16
        %v1000 = vpop.permute.xlu0 %999
        %1003 = vrot.lane.b32.xlu0 %v993, 24
        %v1004 = vpop.permute.xlu0 %1003
        %v1006 = vsel %vm681, %v987, %v996
        %vm1007 = vcmask 130048
        %v1008 = vsel %vm1007, %v1006, %v1000
        %vm1009 = vcmask 195584
        %v1010 = vsel %vm1009, %v1008, %v1004
        %v1011 = vpack.c.bf16 %v1010, %v1010
        %v1012 = vld [vmem:[#allocation7] sm:$0xf]
        %v1013 = vld [vmem:[#allocation7 + $0x4] sm:$0xf]
        %v1014 = vld [vmem:[#allocation7 + $0x8] sm:$0xf]
        %v1015 = vld [vmem:[#allocation7 + $0xc] sm:$0xf]
        %v1016 = vld [vmem:[%s4] sm:$0x1]
        %v1018 = vperm.slane %v1016, 0
        %v1024 = vunpack.c.l.b16 %v1012
        %v1025 = vunpack.c.l.b16 %v1013
        %v1026 = vunpack.c.l.b16 %v1014
        %v1027 = vunpack.c.l.b16 %v1015
        %v1028 = vpack.c.b16 %v1025, %v1024
        %v1029 = vpack.c.b16 %v1027, %v1026
        %v1033 = vsel %vm297, %v1011, 0
        %1035 = vmatpush.bf16.msra.mxu0 0
        %1036 = vmatpush.bf16.msra.mxu0 0
        %1037 = vmatpush.bf16.msra.mxu0 0
        %1038 = vmatpush.bf16.msra.mxu0 0
        %1039 = vmatpush.bf16.msra.mxu0 0
        %1040 = vmatpush.bf16.msra.mxu0 0
        %1041 = vmatpush.bf16.msra.mxu0 %v1029
        %1042 = vmatpush.bf16.msra.mxu0 %v1028
        %1043 = vmatmul.bf16.gmra.mxu0 %v1033
        %v1044 = vpop.f32.mrf.mxu0
        %v1045 = vadd.f32 %v1018, %v1044
        %v1046 = vpop.f32.mrf.mxu0
        %1047 = vdwg.mxu0
        %1048 = vst.msk [vmem:[%s274] sm:$0xff] %vm297, %v1045
        %s1049 = sand.u32 %s141, 1
        %s1050 = scalar_lea.sflag [#allocation4], %s1049
        %s1051 = sand.u32 %s141, 1
        %s1052 = smul.addr %s1051, 8
        %s1053 = scalar_lea.vmem [#allocation8], %s1052
        // Predicated region
        $region53: #{tpu_custom_call.1} parent=39 // pred_check
          %p1054 = pneg %p151
        $region54: #{tpu_custom_call.1} parent=39 // pred_check_branch
          %1056 = sbr.rel (%p1054) target = $region56
        $region55: #{tpu_custom_call.1} parent=39 // pred_region
          %1058 = vsyncadd %s1050, 0
          %s1059 = smul.addr %s23, 8
          %s1060 = scalar_lea.hbm %s5, %s1059
          %s1062 = sshll.u32 %s1053, 4
          %s1063 = int_to_ptr.vmem [resolvable:$true] %s1062
          %s1064 = sshll.u32 %s1060, 4
          %s1065 = int_to_ptr.hbm [resolvable:$true] %s1064
          %1067 = dma.vmem_to_hbm [thread:$0]  %s1063, 128, %s1065, %s1050
        $region56: #{tpu_custom_call.1} parent=39 // pred_fallthru
          _
      $region40: #{tpu_custom_call.1} parent=5 // pred_fallthru
        _
      %p1068 = scmp.le.s32.totalorder 2, %s18
      // Predicated region
      $region57: #{tpu_custom_call.1} parent=5 // pred_check
        %p1069 = pneg %p1068
      $region58: #{tpu_custom_call.1} parent=5 // pred_check_branch
        %1071 = sbr.rel (%p1069) target = $region60
      $region59: #{tpu_custom_call.1} parent=5 // pred_region
        %s1072 = ssub.s32 %s18, 2
        // Predicated region
        $region61: #{tpu_custom_call.1} parent=59 // pred_check
          %p1073 = pneg %p157
        $region62: #{tpu_custom_call.1} parent=59 // pred_check_branch
          %1075 = sbr.rel (%p1073) target = $region64
        $region63: #{tpu_custom_call.1} parent=59 // pred_region
          %s1076 = sand.u32 %s142, 1
          %s1077 = scalar_lea.sflag [#allocation4], %s1076
          %s1078 = sand.u32 %s142, 1
          %s1079 = smul.addr %s1078, 8
          %s1080 = scalar_lea.vmem [#allocation8], %s1079
          %1082 = dma.done %s1077, 128
        $region64: #{tpu_custom_call.1} parent=59 // pred_fallthru
          _
      $region60: #{tpu_custom_call.1} parent=5 // pred_fallthru
        _
    $region6: #{tpu_custom_call.1} parent=1 // loop_footer
      %s22 = sadd.s32 1, %s18
    $region7: #{tpu_custom_call.1} parent=1 // loop_footer_branch
      %17 = sbr.rel target = $region3
    $region8: #{tpu_custom_call.1} parent=1 // loop_exit
      _
    %1083 = vsyncpa [#allocation3], 1
    %s1084 = scalar_lea.sflag [#allocation3], 1
    %1085 = vsyncpa %s1084, 1
    %1086 = vsyncpa [#allocation6], 1
    %1087 = vsyncpa [#allocation4], 1
    %s1088 = scalar_lea.sflag [#allocation4], 1
    %1089 = vsyncpa %s1088, 1

</llo_original>
